<compile_context>
chip_gen: v6e
topology: v6e:2x2x1
jax: 0.10.0
libtpu: 0.0.40
codegen_flags: <defaults>
</compile_context>

<pallas_src>
import functools
import math

import jax
import jax.numpy as jnp
from jax import lax
from jax.experimental import pallas as pl
from jax.experimental.pallas import tpu as pltpu


def _erf(x):
    # Abramowitz & Stegun 7.1.26, |abs err| <= 1.5e-7 (matches exact GELU to f32-level
    # precision).
    a1, a2, a3, a4, a5 = (0.254829592, -0.284496736, 1.421413741,
                          -1.453152027, 1.061405429)
    p = 0.3275911
    sgn = jnp.where(x < 0.0, -1.0, 1.0)
    ax = jnp.abs(x)
    t = 1.0 / (1.0 + p * ax)
    poly = ((((a5 * t + a4) * t + a3) * t + a2) * t + a1) * t
    return sgn * (1.0 - poly * jnp.exp(-ax * ax))


def _gelu_exact(x):
    # nn.GELU() default (approximate='none'): 0.5 * x * (1 + erf(x / sqrt(2)))
    return 0.5 * x * (1.0 + _erf(x * (1.0 / math.sqrt(2.0))))


def mlp_sepconv_kernel(xb_ref, hl_ref, w1_ref, b1_ref, wdw_ref, bdw_ref,
                       w2_ref, b2_ref, o_ref, *, band, W):
    D = xb_ref.shape[-1]
    Dh = w1_ref.shape[-1]
    R = band + 2                                    # band rows + 1-row halo each side

    # ---- assemble the (band+2)-row bf16 input slab; halo rows from the side input ----
    x_mid = xb_ref[0].reshape(band * W, D)          # (band*W, D)
    x_top = hl_ref[0, 0]                            # (W, D): image row r*band-1 (or 0s)
    x_bot = hl_ref[0, 1]                            # (W, D): image row r*band+band (or 0s)
    xs = jnp.concatenate([x_top, x_mid, x_bot], axis=0)   # (R*W, D), sublane-aligned

    # ---- 1x1 conv (pointwise): bf16 x bf16 on the MXU, f32 accumulate ----
    h1 = jnp.dot(xs, w1_ref[...], preferred_element_type=jnp.float32)
    h1 = h1 + b1_ref[...]                           # (R*W, Dh) f32

    # Zero the halo rows that fall outside the image (== the dwconv's zero padding).
    r = pl.program_id(1)
    nbands = pl.num_programs(1)
    rowid = lax.broadcasted_iota(jnp.int32, (R * W, 1), 0)
    valid = jnp.logical_and(jnp.logical_or(rowid >= W, r > 0),
                            jnp.logical_or(rowid < (R - 1) * W, r < nbands - 1))
    h1 = jnp.where(valid, h1, 0.0)
    h1 = h1.reshape(R, W, Dh)                       # banded NHWC view

    # ---- depthwise 3x3 'same': roll along W (XLU) + edge masks, static row slices ----
    # pltpu.roll requires non-negative shifts: a "-1" shift along an axis of length W
    # is the positive cyclic shift W-1; the wrapped column is masked to zero.
    col = lax.broadcasted_iota(jnp.int32, (1, W, 1), 1)
    h_l = jnp.where(col > 0, pltpu.roll(h1, 1, axis=1), 0.0)           # value at w-1
    h_r = jnp.where(col < W - 1, pltpu.roll(h1, W - 1, axis=1), 0.0)   # value at w+1
    shifted = (h_l, h1, h_r)

    wtap = wdw_ref[...]                             # (9, Dh) f32, loaded once
    acc = jnp.zeros((band, W, Dh), jnp.float32)
    for ky in range(3):
        for kx in range(3):
            wk = wtap[ky * 3 + kx].reshape(1, 1, Dh)
            acc = acc + shifted[kx][ky:ky + band] * wk
    acc = acc + bdw_ref[...].reshape(1, 1, Dh)

    # ---- exact GELU (erf-based), f32 ----
    g = _gelu_exact(acc)

    # ---- 1x1 conv back to embed_dim: bf16 into the MXU, f32 accumulate ----
    g2 = g.reshape(band * W, Dh).astype(w2_ref.dtype)
    out = jnp.dot(g2, w2_ref[...], preferred_element_type=jnp.float32)
    out = out + b2_ref[...]                         # (band*W, D)

    # TODO(synk): nn.Dropout(dropout_level) is an inference-mode identity here.
    o_ref[0] = out.reshape(band, W, D).astype(o_ref.dtype)


def _pick_band(H, W, Dh, budget_bytes=10 << 20):
    """Largest row-band (divisor of H) whose f32 intermediates fit in ~budget_bytes."""
    per_row = 5 * W * Dh * 4          # ~5 live (rows, W, Dh) f32 slabs inside the kernel
    cap = max(1, budget_bytes // per_row - 2)
    cap = min(cap, H, 256)
    band = 1
    for cand in range(1, H + 1):
        if H % cand == 0 and cand <= cap:
            band = cand
    return band


def mlp_sep_conv(x, params, band=None):
    """x: (bs, seq, embed_dim); params from init_params()."""
    bs, S, D = x.shape
    H = W = int(math.isqrt(S))
    assert H * W == S, "seq must be a perfect square"
    assert W % 8 == 0, "W must be a multiple of 8 (sublane) for the banded NHWC view"
    w1, b1, wdw, bdw, w2, b2 = params
    Dh = w1.shape[1]

    if band is None:
        band = _pick_band(H, W, Dh)
    assert H % band == 0, "band must divide H"
    n_bands = H // band

    # NHWC view of x plus a tiny halo side-array: halo[b, 2r] / halo[b, 2r+1] hold the
    # image rows just above / below band r (zeros at the image border).  This keeps
    # every kernel input on plain, non-overlapping, auto-pipelined BlockSpecs.
    x4 = x.reshape(bs, H, W, D)
    zrow = jnp.zeros((bs, 1, W, D), x.dtype)
    top = jnp.concatenate([zrow, x4[:, band - 1:H - 1:band]], axis=1)   # (bs, n_bands, W, D)
    bot = jnp.concatenate([x4[:, band::band], zrow], axis=1)            # (bs, n_bands, W, D)
    halo = jnp.stack([top, bot], axis=2).reshape(bs, 2 * n_bands, W, D)

    kernel = functools.partial(mlp_sepconv_kernel, band=band, W=W)

    in_specs = [
        pl.BlockSpec((1, band, W, D), lambda b, r: (b, r, 0, 0)),   # x row-band
        pl.BlockSpec((1, 2, W, D), lambda b, r: (b, r, 0, 0)),      # halo rows
        pl.BlockSpec((D, Dh), lambda b, r: (0, 0)),                 # conv1 1x1 weight
        pl.BlockSpec((1, Dh), lambda b, r: (0, 0)),                 # conv1 bias
        pl.BlockSpec((9, Dh), lambda b, r: (0, 0)),                 # depthwise 3x3 weight
        pl.BlockSpec((1, Dh), lambda b, r: (0, 0)),                 # depthwise bias
        pl.BlockSpec((Dh, D), lambda b, r: (0, 0)),                 # conv2 1x1 weight
        pl.BlockSpec((1, D), lambda b, r: (0, 0)),                  # conv2 bias
    ]
    out4 = pl.pallas_call(
        kernel,
        out_shape=jax.ShapeDtypeStruct((bs, H, W, D), x.dtype),
        grid_spec=pltpu.PrefetchScalarGridSpec(
            num_scalar_prefetch=0,
            grid=(bs, n_bands),
            in_specs=in_specs,
            out_specs=pl.BlockSpec((1, band, W, D), lambda b, r: (b, r, 0, 0)),
        ),
        compiler_params=pltpu.CompilerParams(
            dimension_semantics=("parallel", "parallel"),
            vmem_limit_bytes=32 * 1024 * 1024),
    )(x4, halo, w1, b1, wdw, bdw, w2, b2)
    return out4.reshape(bs, S, D)


def init_params(key, embed_dim, mlp_multiplier, matmul_dtype=jnp.bfloat16):
    """Deterministic synthetic params matching the PyTorch module's shapes.

    PyTorch shapes: conv1 (Dh, D, 1, 1), dwconv (Dh, 1, 3, 3), conv2 (D, Dh, 1, 1).
    Stored pre-transposed for the kernel:
      w1 = conv1.weight[:, :, 0, 0].T  -> (D, Dh)   (bf16, fed to the MXU)
      wdw[ky*3+kx, c] = dwconv.weight[c, 0, ky, kx] -> (9, Dh)  (f32, VPU)
      w2 = conv2.weight[:, :, 0, 0].T  -> (Dh, D)   (bf16, fed to the MXU)
    """
    Dh = embed_dim * mlp_multiplier
    ks = jax.random.split(key, 6)
    w1 = (jax.random.normal(ks[0], (embed_dim, Dh), jnp.float32) * 0.05).astype(matmul_dtype)
    b1 = jax.random.normal(ks[1], (1, Dh), jnp.float32) * 0.05
    wdw = jax.random.normal(ks[2], (9, Dh), jnp.float32) * 0.05
    bdw = jax.random.normal(ks[3], (1, Dh), jnp.float32) * 0.05
    w2 = (jax.random.normal(ks[4], (Dh, embed_dim), jnp.float32) * 0.05).astype(matmul_dtype)
    b2 = jax.random.normal(ks[5], (1, embed_dim), jnp.float32) * 0.05
    return w1, b1, wdw, bdw, w2, b2


def reference(x, params):
    """Pure-JAX f32 reference of the PyTorch forward pass (for verification)."""
    w1, b1, wdw, bdw, w2, b2 = [jnp.asarray(p, jnp.float32) for p in params]
    xf = x.astype(jnp.float32)
    bs, S, D = x.shape
    H = W = int(math.isqrt(S))
    Dh = w1.shape[1]
    h1 = jnp.einsum('bsd,de->bse', xf, w1) + b1
    h1 = h1.reshape(bs, H, W, Dh)
    p = jnp.pad(h1, ((0, 0), (1, 1), (1, 1), (0, 0)))
    acc = jnp.zeros((bs, H, W, Dh), jnp.float32)
    for ky in range(3):
        for kx in range(3):
            acc = acc + p[:, ky:ky + H, kx:kx + W, :] * wdw[ky * 3 + kx].reshape(1, 1, 1, Dh)
    acc = acc + bdw.reshape(1, 1, 1, Dh)
    g = jax.nn.gelu(acc, approximate=False)
    out = jnp.einsum('bhwe,ed->bhwd', g, w2) + b2.reshape(1, 1, 1, D)
    return out.reshape(bs, S, D)


if __name__ == "__main__":
    def run_case(key, embed_dim, mlp_multiplier, H, W, bs, band):
        S = H * W
        kx, kp = jax.random.split(key)
        x = jax.random.normal(kx, (bs, S, embed_dim), jnp.float32).astype(jnp.bfloat16)
        params = init_params(kp, embed_dim, mlp_multiplier)
        out = jax.block_until_ready(mlp_sep_conv(x, params, band=band))
        ref = jax.block_until_ready(reference(x, params))
        assert out.shape == (bs, S, embed_dim)
        err = float(jnp.max(jnp.abs(out.astype(jnp.float32) - ref)))
        # bf16 MXU inputs + bf16 output vs f32 reference -> ~1e-3 level differences.
        assert err < 1e-2, f"max abs err {err}"
        return err

    key0 = jax.random.PRNGKey(0)
    k1, k2 = jax.random.split(key0)
    # MXU/lane-aligned channels; 4 row-bands -> exercises border and interior halos.
    run_case(k1, embed_dim=128, mlp_multiplier=2, H=16, W=16, bs=2, band=4)
    # Small unaligned-channel config (the original module's toy sizes).
    run_case(k2, embed_dim=32, mlp_multiplier=2, H=8, W=8, bs=2, band=4)
    print("KERNEL_OK")
</pallas_src>

<mosaic_0001>
module attributes {stable_mosaic.version = 11 : i64} {
  func.func @mlp_sepconv_kernel(%arg0: i32, %arg1: i32, %arg2: memref<1x4x16x128xbf16, #tpu.memory_space<vmem>>, %arg3: memref<1x2x16x128xbf16, #tpu.memory_space<vmem>>, %arg4: memref<128x256xbf16, #tpu.memory_space<vmem>>, %arg5: memref<1x256xf32, #tpu.memory_space<vmem>>, %arg6: memref<9x256xf32, #tpu.memory_space<vmem>>, %arg7: memref<1x256xf32, #tpu.memory_space<vmem>>, %arg8: memref<256x128xbf16, #tpu.memory_space<vmem>>, %arg9: memref<1x128xf32, #tpu.memory_space<vmem>>, %arg10: memref<1x4x16x128xbf16, #tpu.memory_space<vmem>>) attributes {dimension_semantics = [#tpu.dimension_semantics<parallel>, #tpu.dimension_semantics<parallel>], iteration_bounds = array<i64: 2, 4>, scalar_prefetch = 0 : i64, scratch_operands = 0 : i64, tpu.core_type = #tpu.core_type<tc>, window_params = [{transform_indices = @transform_0, window_bounds = array<i64: 1, 4, 16, 128>}, {transform_indices = @transform_1, window_bounds = array<i64: 1, 2, 16, 128>}, {pipeline_mode = #tpu.pipeline_mode<synchronous>, transform_indices = @transform_2, window_bounds = array<i64: 128, 256>}, {pipeline_mode = #tpu.pipeline_mode<synchronous>, transform_indices = @transform_3, window_bounds = array<i64: 1, 256>}, {pipeline_mode = #tpu.pipeline_mode<synchronous>, transform_indices = @transform_4, window_bounds = array<i64: 9, 256>}, {pipeline_mode = #tpu.pipeline_mode<synchronous>, transform_indices = @transform_5, window_bounds = array<i64: 1, 256>}, {pipeline_mode = #tpu.pipeline_mode<synchronous>, transform_indices = @transform_6, window_bounds = array<i64: 256, 128>}, {pipeline_mode = #tpu.pipeline_mode<synchronous>, transform_indices = @transform_7, window_bounds = array<i64: 1, 128>}, {transform_indices = @transform_8, window_bounds = array<i64: 1, 4, 16, 128>}]} {
    %c0 = arith.constant 0 : index
    %c0_0 = arith.constant 0 : index
    %c0_1 = arith.constant 0 : index
    %c0_2 = arith.constant 0 : index
    %0 = vector.load %arg2[%c0, %c0_0, %c0_1, %c0_2] : memref<1x4x16x128xbf16, #tpu.memory_space<vmem>>, vector<1x4x16x128xbf16>
    %1 = vector.shape_cast %0 : vector<1x4x16x128xbf16> to vector<4x16x128xbf16>
    %2 = vector.shape_cast %1 : vector<4x16x128xbf16> to vector<64x128xbf16>
    %c0_3 = arith.constant 0 : index
    %c0_4 = arith.constant 0 : index
    %c0_5 = arith.constant 0 : index
    %c0_6 = arith.constant 0 : index
    %3 = vector.load %arg3[%c0_3, %c0_4, %c0_5, %c0_6] : memref<1x2x16x128xbf16, #tpu.memory_space<vmem>>, vector<1x1x16x128xbf16>
    %4 = vector.shape_cast %3 : vector<1x1x16x128xbf16> to vector<16x128xbf16>
    %c0_7 = arith.constant 0 : index
    %c1 = arith.constant 1 : index
    %c0_8 = arith.constant 0 : index
    %c0_9 = arith.constant 0 : index
    %5 = vector.load %arg3[%c0_7, %c1, %c0_8, %c0_9] : memref<1x2x16x128xbf16, #tpu.memory_space<vmem>>, vector<1x1x16x128xbf16>
    %6 = vector.shape_cast %5 : vector<1x1x16x128xbf16> to vector<16x128xbf16>
    %7 = tpu.concatenate %4, %2, %6 in 0 : vector<16x128xbf16>, vector<64x128xbf16>, vector<16x128xbf16> -> vector<96x128xbf16>
    %c0_10 = arith.constant 0 : index
    %c0_11 = arith.constant 0 : index
    %8 = vector.load %arg4[%c0_10, %c0_11] : memref<128x256xbf16, #tpu.memory_space<vmem>>, vector<128x256xbf16>
    %cst = arith.constant dense<0.000000e+00> : vector<96x256xf32>
    %9 = tpu.matmul %7, %8, %cst {dimension_numbers = #tpu.dot_dimension_numbers<[1], [0], [0], [1], [0, 0, 1, 1], [], []>} : vector<96x128xbf16>, vector<128x256xbf16>, vector<96x256xf32> -> vector<96x256xf32>
    %c0_12 = arith.constant 0 : index
    %c0_13 = arith.constant 0 : index
    %10 = vector.load %arg5[%c0_12, %c0_13] : memref<1x256xf32, #tpu.memory_space<vmem>>, vector<1x256xf32>
    %11 = vector.broadcast %10 : vector<1x256xf32> to vector<96x256xf32>
    %12 = arith.addf %9, %11 : vector<96x256xf32>
    %13 = tpu.iota {dimensions = array<i32: 0>} : vector<96x1xi32>
    %c16_i32 = arith.constant 16 : i32
    %14 = vector.broadcast %c16_i32 : i32 to vector<96x1xi32>
    %15 = arith.cmpi sge, %13, %14 : vector<96x1xi32>
    %c0_i32 = arith.constant 0 : i32
    %16 = arith.cmpi sgt, %arg1, %c0_i32 : i32
    %17 = vector.broadcast %16 : i1 to vector<96x1xi1>
    %18 = arith.ori %15, %17 : vector<96x1xi1>
    %c80_i32 = arith.constant 80 : i32
    %19 = vector.broadcast %c80_i32 : i32 to vector<96x1xi32>
    %20 = arith.cmpi slt, %13, %19 : vector<96x1xi32>
    %c3_i32 = arith.constant 3 : i32
    %21 = arith.cmpi slt, %arg1, %c3_i32 : i32
    %22 = vector.broadcast %21 : i1 to vector<96x1xi1>
    %23 = arith.ori %20, %22 : vector<96x1xi1>
    %24 = arith.andi %18, %23 : vector<96x1xi1>
    %cst_14 = arith.constant 0.000000e+00 : f32
    %25 = vector.shape_cast %24 : vector<96x1xi1> to vector<96x1xi1>
    %26 = vector.broadcast %25 : vector<96x1xi1> to vector<96x256xi1>
    %27 = vector.broadcast %cst_14 : f32 to vector<96x256xf32>
    %28 = arith.select %26, %12, %27 : vector<96x256xi1>, vector<96x256xf32>
    %29 = vector.shape_cast %28 : vector<96x256xf32> to vector<6x16x256xf32>
    %30 = tpu.iota {dimensions = array<i32: 1>} : vector<1x16x1xi32>
    %c0_i32_15 = arith.constant 0 : i32
    %31 = vector.broadcast %c0_i32_15 : i32 to vector<1x16x1xi32>
    %32 = arith.cmpi sgt, %30, %31 : vector<1x16x1xi32>
    %c1_i32 = arith.constant 1 : i32
    %33 = tpu.dynamic_rotate %29 by %c1_i32 dim 1 : vector<6x16x256xf32>, i32 -> vector<6x16x256xf32>
    %cst_16 = arith.constant 0.000000e+00 : f32
    %34 = vector.shape_cast %32 : vector<1x16x1xi1> to vector<1x16x1xi1>
    %35 = vector.broadcast %34 : vector<1x16x1xi1> to vector<6x16x256xi1>
    %36 = vector.broadcast %cst_16 : f32 to vector<6x16x256xf32>
    %37 = arith.select %35, %33, %36 : vector<6x16x256xi1>, vector<6x16x256xf32>
    %c15_i32 = arith.constant 15 : i32
    %38 = vector.broadcast %c15_i32 : i32 to vector<1x16x1xi32>
    %39 = arith.cmpi slt, %30, %38 : vector<1x16x1xi32>
    %c15_i32_17 = arith.constant 15 : i32
    %40 = tpu.dynamic_rotate %29 by %c15_i32_17 dim 1 : vector<6x16x256xf32>, i32 -> vector<6x16x256xf32>
    %cst_18 = arith.constant 0.000000e+00 : f32
    %41 = vector.shape_cast %39 : vector<1x16x1xi1> to vector<1x16x1xi1>
    %42 = vector.broadcast %41 : vector<1x16x1xi1> to vector<6x16x256xi1>
    %43 = vector.broadcast %cst_18 : f32 to vector<6x16x256xf32>
    %44 = arith.select %42, %40, %43 : vector<6x16x256xi1>, vector<6x16x256xf32>
    %c0_19 = arith.constant 0 : index
    %c0_20 = arith.constant 0 : index
    %45 = vector.load %arg6[%c0_19, %c0_20] : memref<9x256xf32, #tpu.memory_space<vmem>>, vector<9x256xf32>
    %cst_21 = arith.constant 0.000000e+00 : f32
    %46 = vector.broadcast %cst_21 : f32 to vector<4x16x256xf32>
    %47 = vector.extract_strided_slice %45 {offsets = [0, 0], sizes = [1, 256], strides = [1, 1]} : vector<9x256xf32> to vector<1x256xf32>
    %48 = vector.shape_cast %47 : vector<1x256xf32> to vector<256xf32>
    %49 = vector.shape_cast %48 : vector<256xf32> to vector<1x1x256xf32>
    %50 = vector.extract_strided_slice %37 {offsets = [0, 0, 0], sizes = [4, 16, 256], strides = [1, 1, 1]} : vector<6x16x256xf32> to vector<4x16x256xf32>
    %51 = vector.broadcast %49 : vector<1x1x256xf32> to vector<4x16x256xf32>
    %52 = arith.mulf %50, %51 : vector<4x16x256xf32>
    %53 = arith.addf %46, %52 : vector<4x16x256xf32>
    %54 = vector.extract_strided_slice %45 {offsets = [1, 0], sizes = [1, 256], strides = [1, 1]} : vector<9x256xf32> to vector<1x256xf32>
    %55 = vector.shape_cast %54 : vector<1x256xf32> to vector<256xf32>
    %56 = vector.shape_cast %55 : vector<256xf32> to vector<1x1x256xf32>
    %57 = vector.extract_strided_slice %29 {offsets = [0, 0, 0], sizes = [4, 16, 256], strides = [1, 1, 1]} : vector<6x16x256xf32> to vector<4x16x256xf32>
    %58 = vector.broadcast %56 : vector<1x1x256xf32> to vector<4x16x256xf32>
    %59 = arith.mulf %57, %58 : vector<4x16x256xf32>
    %60 = arith.addf %53, %59 : vector<4x16x256xf32>
    %61 = vector.extract_strided_slice %45 {offsets = [2, 0], sizes = [1, 256], strides = [1, 1]} : vector<9x256xf32> to vector<1x256xf32>
    %62 = vector.shape_cast %61 : vector<1x256xf32> to vector<256xf32>
    %63 = vector.shape_cast %62 : vector<256xf32> to vector<1x1x256xf32>
    %64 = vector.extract_strided_slice %44 {offsets = [0, 0, 0], sizes = [4, 16, 256], strides = [1, 1, 1]} : vector<6x16x256xf32> to vector<4x16x256xf32>
    %65 = vector.broadcast %63 : vector<1x1x256xf32> to vector<4x16x256xf32>
    %66 = arith.mulf %64, %65 : vector<4x16x256xf32>
    %67 = arith.addf %60, %66 : vector<4x16x256xf32>
    %68 = vector.extract_strided_slice %45 {offsets = [3, 0], sizes = [1, 256], strides = [1, 1]} : vector<9x256xf32> to vector<1x256xf32>
    %69 = vector.shape_cast %68 : vector<1x256xf32> to vector<256xf32>
    %70 = vector.shape_cast %69 : vector<256xf32> to vector<1x1x256xf32>
    %71 = vector.extract_strided_slice %37 {offsets = [1, 0, 0], sizes = [4, 16, 256], strides = [1, 1, 1]} : vector<6x16x256xf32> to vector<4x16x256xf32>
    %72 = vector.broadcast %70 : vector<1x1x256xf32> to vector<4x16x256xf32>
    %73 = arith.mulf %71, %72 : vector<4x16x256xf32>
    %74 = arith.addf %67, %73 : vector<4x16x256xf32>
    %75 = vector.extract_strided_slice %45 {offsets = [4, 0], sizes = [1, 256], strides = [1, 1]} : vector<9x256xf32> to vector<1x256xf32>
    %76 = vector.shape_cast %75 : vector<1x256xf32> to vector<256xf32>
    %77 = vector.shape_cast %76 : vector<256xf32> to vector<1x1x256xf32>
    %78 = vector.extract_strided_slice %29 {offsets = [1, 0, 0], sizes = [4, 16, 256], strides = [1, 1, 1]} : vector<6x16x256xf32> to vector<4x16x256xf32>
    %79 = vector.broadcast %77 : vector<1x1x256xf32> to vector<4x16x256xf32>
    %80 = arith.mulf %78, %79 : vector<4x16x256xf32>
    %81 = arith.addf %74, %80 : vector<4x16x256xf32>
    %82 = vector.extract_strided_slice %45 {offsets = [5, 0], sizes = [1, 256], strides = [1, 1]} : vector<9x256xf32> to vector<1x256xf32>
    %83 = vector.shape_cast %82 : vector<1x256xf32> to vector<256xf32>
    %84 = vector.shape_cast %83 : vector<256xf32> to vector<1x1x256xf32>
    %85 = vector.extract_strided_slice %44 {offsets = [1, 0, 0], sizes = [4, 16, 256], strides = [1, 1, 1]} : vector<6x16x256xf32> to vector<4x16x256xf32>
    %86 = vector.broadcast %84 : vector<1x1x256xf32> to vector<4x16x256xf32>
    %87 = arith.mulf %85, %86 : vector<4x16x256xf32>
    %88 = arith.addf %81, %87 : vector<4x16x256xf32>
    %89 = vector.extract_strided_slice %45 {offsets = [6, 0], sizes = [1, 256], strides = [1, 1]} : vector<9x256xf32> to vector<1x256xf32>
    %90 = vector.shape_cast %89 : vector<1x256xf32> to vector<256xf32>
    %91 = vector.shape_cast %90 : vector<256xf32> to vector<1x1x256xf32>
    %92 = vector.extract_strided_slice %37 {offsets = [2, 0, 0], sizes = [4, 16, 256], strides = [1, 1, 1]} : vector<6x16x256xf32> to vector<4x16x256xf32>
    %93 = vector.broadcast %91 : vector<1x1x256xf32> to vector<4x16x256xf32>
    %94 = arith.mulf %92, %93 : vector<4x16x256xf32>
    %95 = arith.addf %88, %94 : vector<4x16x256xf32>
    %96 = vector.extract_strided_slice %45 {offsets = [7, 0], sizes = [1, 256], strides = [1, 1]} : vector<9x256xf32> to vector<1x256xf32>
    %97 = vector.shape_cast %96 : vector<1x256xf32> to vector<256xf32>
    %98 = vector.shape_cast %97 : vector<256xf32> to vector<1x1x256xf32>
    %99 = vector.extract_strided_slice %29 {offsets = [2, 0, 0], sizes = [4, 16, 256], strides = [1, 1, 1]} : vector<6x16x256xf32> to vector<4x16x256xf32>
    %100 = vector.broadcast %98 : vector<1x1x256xf32> to vector<4x16x256xf32>
    %101 = arith.mulf %99, %100 : vector<4x16x256xf32>
    %102 = arith.addf %95, %101 : vector<4x16x256xf32>
    %103 = vector.extract_strided_slice %45 {offsets = [8, 0], sizes = [1, 256], strides = [1, 1]} : vector<9x256xf32> to vector<1x256xf32>
    %104 = vector.shape_cast %103 : vector<1x256xf32> to vector<256xf32>
    %105 = vector.shape_cast %104 : vector<256xf32> to vector<1x1x256xf32>
    %106 = vector.extract_strided_slice %44 {offsets = [2, 0, 0], sizes = [4, 16, 256], strides = [1, 1, 1]} : vector<6x16x256xf32> to vector<4x16x256xf32>
    %107 = vector.broadcast %105 : vector<1x1x256xf32> to vector<4x16x256xf32>
    %108 = arith.mulf %106, %107 : vector<4x16x256xf32>
    %109 = arith.addf %102, %108 : vector<4x16x256xf32>
    %c0_22 = arith.constant 0 : index
    %c0_23 = arith.constant 0 : index
    %110 = vector.load %arg7[%c0_22, %c0_23] : memref<1x256xf32, #tpu.memory_space<vmem>>, vector<1x256xf32>
    %111 = vector.shape_cast %110 : vector<1x256xf32> to vector<1x1x256xf32>
    %112 = vector.broadcast %111 : vector<1x1x256xf32> to vector<4x16x256xf32>
    %113 = arith.addf %109, %112 : vector<4x16x256xf32>
    %cst_24 = arith.constant 5.000000e-01 : f32
    %114 = vector.broadcast %cst_24 : f32 to vector<4x16x256xf32>
    %115 = arith.mulf %114, %113 : vector<4x16x256xf32>
    %cst_25 = arith.constant 0.707106769 : f32
    %116 = vector.broadcast %cst_25 : f32 to vector<4x16x256xf32>
    %117 = arith.mulf %113, %116 : vector<4x16x256xf32>
    %cst_26 = arith.constant 0.000000e+00 : f32
    %118 = vector.broadcast %cst_26 : f32 to vector<4x16x256xf32>
    %119 = arith.cmpf olt, %117, %118 : vector<4x16x256xf32>
    %cst_27 = arith.constant -1.000000e+00 : f32
    %cst_28 = arith.constant 1.000000e+00 : f32
    %120 = vector.broadcast %cst_27 : f32 to vector<4x16x256xf32>
    %121 = vector.broadcast %cst_28 : f32 to vector<4x16x256xf32>
    %122 = arith.select %119, %120, %121 : vector<4x16x256xi1>, vector<4x16x256xf32>
    %123 = math.absf %117 : vector<4x16x256xf32>
    %cst_29 = arith.constant 0.327591091 : f32
    %124 = vector.broadcast %cst_29 : f32 to vector<4x16x256xf32>
    %125 = arith.mulf %124, %123 : vector<4x16x256xf32>
    %cst_30 = arith.constant 1.000000e+00 : f32
    %126 = vector.broadcast %cst_30 : f32 to vector<4x16x256xf32>
    %127 = arith.addf %126, %125 : vector<4x16x256xf32>
    %cst_31 = arith.constant 1.000000e+00 : f32
    %128 = vector.broadcast %cst_31 : f32 to vector<4x16x256xf32>
    %129 = arith.divf %128, %127 : vector<4x16x256xf32>
    %cst_32 = arith.constant 1.06140542 : f32
    %130 = vector.broadcast %cst_32 : f32 to vector<4x16x256xf32>
    %131 = arith.mulf %130, %129 : vector<4x16x256xf32>
    %cst_33 = arith.constant -1.45315206 : f32
    %132 = vector.broadcast %cst_33 : f32 to vector<4x16x256xf32>
    %133 = arith.addf %131, %132 : vector<4x16x256xf32>
    %134 = arith.mulf %133, %129 : vector<4x16x256xf32>
    %cst_34 = arith.constant 1.42141378 : f32
    %135 = vector.broadcast %cst_34 : f32 to vector<4x16x256xf32>
    %136 = arith.addf %134, %135 : vector<4x16x256xf32>
    %137 = arith.mulf %136, %129 : vector<4x16x256xf32>
    %cst_35 = arith.constant -0.284496725 : f32
    %138 = vector.broadcast %cst_35 : f32 to vector<4x16x256xf32>
    %139 = arith.addf %137, %138 : vector<4x16x256xf32>
    %140 = arith.mulf %139, %129 : vector<4x16x256xf32>
    %cst_36 = arith.constant 0.254829586 : f32
    %141 = vector.broadcast %cst_36 : f32 to vector<4x16x256xf32>
    %142 = arith.addf %140, %141 : vector<4x16x256xf32>
    %143 = arith.mulf %142, %129 : vector<4x16x256xf32>
    %cst_37 = arith.constant 0.000000e+00 : f32
    %144 = vector.broadcast %cst_37 : f32 to vector<4x16x256xf32>
    %145 = arith.subf %144, %123 : vector<4x16x256xf32>
    %146 = arith.mulf %145, %123 : vector<4x16x256xf32>
    %147 = math.exp %146 : vector<4x16x256xf32>
    %148 = arith.mulf %143, %147 : vector<4x16x256xf32>
    %cst_38 = arith.constant 1.000000e+00 : f32
    %149 = vector.broadcast %cst_38 : f32 to vector<4x16x256xf32>
    %150 = arith.subf %149, %148 : vector<4x16x256xf32>
    %151 = arith.mulf %122, %150 : vector<4x16x256xf32>
    %cst_39 = arith.constant 1.000000e+00 : f32
    %152 = vector.broadcast %cst_39 : f32 to vector<4x16x256xf32>
    %153 = arith.addf %152, %151 : vector<4x16x256xf32>
    %154 = arith.mulf %115, %153 : vector<4x16x256xf32>
    %155 = vector.shape_cast %154 : vector<4x16x256xf32> to vector<64x256xf32>
    %156 = arith.truncf %155 : vector<64x256xf32> to vector<64x256xbf16>
    %c0_40 = arith.constant 0 : index
    %c0_41 = arith.constant 0 : index
    %157 = vector.load %arg8[%c0_40, %c0_41] : memref<256x128xbf16, #tpu.memory_space<vmem>>, vector<256x128xbf16>
    %cst_42 = arith.constant dense<0.000000e+00> : vector<64x128xf32>
    %158 = tpu.matmul %156, %157, %cst_42 {dimension_numbers = #tpu.dot_dimension_numbers<[1], [0], [0], [1], [0, 0, 1, 1], [], []>} : vector<64x256xbf16>, vector<256x128xbf16>, vector<64x128xf32> -> vector<64x128xf32>
    %c0_43 = arith.constant 0 : index
    %c0_44 = arith.constant 0 : index
    %159 = vector.load %arg9[%c0_43, %c0_44] : memref<1x128xf32, #tpu.memory_space<vmem>>, vector<1x128xf32>
    %160 = vector.broadcast %159 : vector<1x128xf32> to vector<64x128xf32>
    %161 = arith.addf %158, %160 : vector<64x128xf32>
    %162 = vector.shape_cast %161 : vector<64x128xf32> to vector<4x16x128xf32>
    %163 = arith.truncf %162 : vector<4x16x128xf32> to vector<4x16x128xbf16>
    %c0_45 = arith.constant 0 : index
    %c0_46 = arith.constant 0 : index
    %c0_47 = arith.constant 0 : index
    %c0_48 = arith.constant 0 : index
    %164 = vector.load %arg10[%c0_45, %c0_46, %c0_47, %c0_48] : memref<1x4x16x128xbf16, #tpu.memory_space<vmem>>, vector<1x4x16x128xbf16>
    %165 = vector.shape_cast %164 : vector<1x4x16x128xbf16> to vector<4x16x128xbf16>
    %166 = vector.shape_cast %163 : vector<4x16x128xbf16> to vector<1x4x16x128xbf16>
    tpu.vector_store %arg10[%c0_45, %c0_46, %c0_47, %c0_48], %166 {strides = array<i32>} : memref<1x4x16x128xbf16, #tpu.memory_space<vmem>>, vector<1x4x16x128xbf16>,
    return
  }
  func.func @transform_0(%arg0: i32, %arg1: i32) -> (i32, i32, i32, i32) {
    %c0_i32 = arith.constant 0 : i32
    %c0_i32_0 = arith.constant 0 : i32
    %c0_i32_1 = arith.constant 0 : i32
    return %arg0, %arg1, %c0_i32, %c0_i32_0 : i32, i32, i32, i32
  }
  func.func @transform_1(%arg0: i32, %arg1: i32) -> (i32, i32, i32, i32) {
    %c0_i32 = arith.constant 0 : i32
    %c0_i32_0 = arith.constant 0 : i32
    %c0_i32_1 = arith.constant 0 : i32
    return %arg0, %arg1, %c0_i32, %c0_i32_0 : i32, i32, i32, i32
  }
  func.func @transform_2(%arg0: i32, %arg1: i32) -> (i32, i32) {
    %c0_i32 = arith.constant 0 : i32
    %c0_i32_0 = arith.constant 0 : i32
    %c0_i32_1 = arith.constant 0 : i32
    return %c0_i32, %c0_i32_0 : i32, i32
  }
  func.func @transform_3(%arg0: i32, %arg1: i32) -> (i32, i32) {
    %c0_i32 = arith.constant 0 : i32
    %c0_i32_0 = arith.constant 0 : i32
    %c0_i32_1 = arith.constant 0 : i32
    return %c0_i32, %c0_i32_0 : i32, i32
  }
  func.func @transform_4(%arg0: i32, %arg1: i32) -> (i32, i32) {
    %c0_i32 = arith.constant 0 : i32
    %c0_i32_0 = arith.constant 0 : i32
    %c0_i32_1 = arith.constant 0 : i32
    return %c0_i32, %c0_i32_0 : i32, i32
  }
  func.func @transform_5(%arg0: i32, %arg1: i32) -> (i32, i32) {
    %c0_i32 = arith.constant 0 : i32
    %c0_i32_0 = arith.constant 0 : i32
    %c0_i32_1 = arith.constant 0 : i32
    return %c0_i32, %c0_i32_0 : i32, i32
  }
  func.func @transform_6(%arg0: i32, %arg1: i32) -> (i32, i32) {
    %c0_i32 = arith.constant 0 : i32
    %c0_i32_0 = arith.constant 0 : i32
    %c0_i32_1 = arith.constant 0 : i32
    return %c0_i32, %c0_i32_0 : i32, i32
  }
  func.func @transform_7(%arg0: i32, %arg1: i32) -> (i32, i32) {
    %c0_i32 = arith.constant 0 : i32
    %c0_i32_0 = arith.constant 0 : i32
    %c0_i32_1 = arith.constant 0 : i32
    return %c0_i32, %c0_i32_0 : i32, i32
  }
  func.func @transform_8(%arg0: i32, %arg1: i32) -> (i32, i32, i32, i32) {
    %c0_i32 = arith.constant 0 : i32
    %c0_i32_0 = arith.constant 0 : i32
    %c0_i32_1 = arith.constant 0 : i32
    return %arg0, %arg1, %c0_i32, %c0_i32_0 : i32, i32, i32, i32
  }
}

</mosaic_0001>

<llo_original>
// kernel: tpu_custom_call.1
$region0: #{tpu_custom_call.1}
  #allocation0 [shape = 'u32[]', space=smem, size = 0x4, offset = 0x4, fixed_abs, tag = 'smem constant byte address 0x4 - core index']
  #allocation1 [shape = 'u32[144,128]{1,0:T(1,128)}', space=vmem, size = 0x12000, scoped, tag = 'internal scratch']
  %s0 = inlined_call_operand.hbm [shape: bf16[2,16,16,128], index: 0, kind: input, shape index: {}]
  %s1 = inlined_call_operand.hbm [shape: bf16[2,8,16,128], index: 1, kind: input, shape index: {}]
  %s2 = inlined_call_operand.hbm [shape: bf16[128,256], index: 2, kind: input, shape index: {}]
  %s3 = inlined_call_operand.vmem [shape: f32[1,256], index: 3, kind: input, shape index: {}]
  %s4 = inlined_call_operand.hbm [shape: f32[9,256], index: 4, kind: input, shape index: {}]
  %s5 = inlined_call_operand.vmem [shape: f32[1,256], index: 5, kind: input, shape index: {}]
  %s6 = inlined_call_operand.hbm [shape: bf16[256,128], index: 6, kind: input, shape index: {}]
  %s7 = inlined_call_operand.vmem [shape: f32[1,128], index: 7, kind: input, shape index: {}]
  %s8 = inlined_call_operand.hbm [shape: bf16[2,16,16,128], index: 8, kind: output, shape index: {}]
  %s9 = sld [smem:[#allocation0]]
  $region85: #{tpu_custom_call.1} parent=0
    _
  %s11 = ssub.s32 1, %s9
  %s12 = scalar_select 0, %s11, %s9
  $region1: #{tpu_custom_call.1} parent=0
    #allocation2 [shape = 'u8[32768]{0}', space=vmem, size = 0x8000, scoped, tag = 'input window, operand 0']
    #allocation3 [shape = 's32[2]{0}', space=sflag, size = 0x8, scoped, tag = 'scoped memory for tpu_custom_call.1']
    #allocation4 [shape = 's32[2]{0}', space=sflag, size = 0x8, scoped, tag = 'scoped memory for tpu_custom_call.1']
    #allocation5 [shape = 'u8[16384]{0}', space=vmem, size = 0x4000, scoped, tag = 'input window, operand 1']
    #allocation6 [shape = 's32[2]{0}', space=sflag, size = 0x8, scoped, tag = 'scoped memory for tpu_custom_call.1']
    #allocation7 [shape = 'u8[65536]{0}', space=vmem, size = 0x10000, scoped, tag = 'input window, operand 2, single buffered']
    #allocation8 [shape = 'u8[16384]{0}', space=vmem, size = 0x4000, scoped, tag = 'input window, operand 4, single buffered']
    #allocation9 [shape = 's32[1]{0}', space=sflag, size = 0x4, scoped, tag = 'scoped memory for tpu_custom_call.1']
    #allocation10 [shape = 'u8[65536]{0}', space=vmem, size = 0x10000, scoped, tag = 'input window, operand 6, single buffered']
    #allocation11 [shape = 'u8[32768]{0}', space=vmem, size = 0x8000, scoped, tag = 'output window, operand 0']
    %13 = vsyncpa [#allocation3], 0
    %s14 = scalar_lea.sflag [#allocation3], 1
    %15 = vsyncpa %s14, 0
    %16 = vsyncpa [#allocation6], 0
    %s17 = scalar_lea.sflag [#allocation6], 1
    %18 = vsyncpa %s17, 0
    %19 = vsyncpa [#allocation9], 0
    %20 = vsyncpa [#allocation4], 0
    %s21 = scalar_lea.sflag [#allocation4], 1
    %22 = vsyncpa %s21, 0
    loop: start=0, step=1, limit=10
    $region2: #{tpu_custom_call.1} parent=1 // loop_pre_header
      _
    $region3: #{tpu_custom_call.1} parent=1 // loop_header
      %s24 = sphi 0, %s28
      %p25 = scmp.ge.s32.totalorder %s24, 10
      %s31 = sphi 0, %s43
      %s32 = sphi 0, %s39
      %s33 = sphi 0, %s31
      %s34 = sphi 0, %s32
      %s35 = sphi 0, %s33
      %s36 = sphi 0, %s34
      %s48 = sphi 0, %s50
      %s51 = sphi 0, %s48
      %s52 = sphi 0, %s51
      %s68 = sphi 0, %s52
      %s76 = sphi 0, %s78
      %s79 = sphi 0, %s76
      %s80 = sphi 0, %s79
      %s96 = sphi 0, %s80
      %s100 = sphi 0, %s100
      %s102 = sphi 0, %s100
      %s103 = sphi 0, %s102
      %s117 = sphi 0, %s103
      %s121 = sphi 0, %s121
      %s123 = sphi 0, %s121
      %s124 = sphi 0, %s123
      %s138 = sphi 0, %s124
      %s142 = sphi 0, %s142
      %s144 = sphi 0, %s142
      %s145 = sphi 0, %s144
      %s159 = sphi 0, %s145
      %s163 = sphi 0, %s163
      %s165 = sphi 0, %s163
      %s166 = sphi 0, %s165
      %s180 = sphi 0, %s166
      %s184 = sphi 0, %s184
      %s186 = sphi 0, %s184
      %s187 = sphi 0, %s186
      %s201 = sphi 0, %s187
      %s205 = sphi 0, %s205
      %s207 = sphi 0, %s205
      %s208 = sphi 0, %s207
      %s222 = sphi 0, %s208
      %s230 = sphi 0, %s232
      %s233 = sphi 0, %s230
      %s234 = sphi 0, %s233
      %s250 = sphi 0, %s234
    $region4: #{tpu_custom_call.1} parent=1 // loop_header_branch
      %27 = sbr.rel (%p25) target = $region8
    $region5: #{tpu_custom_call.1} parent=1 // loop_body
      %s29 = ssub.s32 %s24, 1
      %s30 = ssub.s32 %s24, 2
      %s37 = sadd.s32 1, %s32
      %p38 = scmp.ge.s32.totalorder %s37, 4
      %s39 = scalar_select %p38, 0, %s37
      %s40 = sadd.s32 1, %s31
      %s41 = scalar_select %p38, %s40, %s31
      %p42 = scmp.ge.s32.totalorder %s41, 2
      %s43 = scalar_select %p42, 0, %s41
      %s44 = ssub.s32 %s31, %s43
      %s45 = ssub.s32 %s32, %s39
      %s46 = sor.u32 %s44, %s45
      %p47 = scmp.eq.s32.totalorder %s46, 0
      %s49 = sadd.s32 %s48, 1
      %s50 = scalar_select %p47, %s48, %s49
      %p53 = pneg %p47
      %p54 = scmp.eq.s32.totalorder %s24, 7
      %p55 = por %p53, %p54
      %p56 = scmp.ne.s32.totalorder %s48, %s51
      %p57 = scmp.eq.s32.totalorder %s24, 0
      %p58 = por %p56, %p57
      %p59 = scmp.ne.s32.totalorder %s48, %s51
      %p60 = scmp.eq.s32.totalorder %s29, 7
      %p61 = por %p59, %p60
      %p62 = scmp.ne.s32.totalorder %s51, %s52
      %p63 = scmp.eq.s32.totalorder %s29, 0
      %p64 = por %p62, %p63
      %p65 = scmp.ne.s32.totalorder %s51, %s52
      %p66 = scmp.eq.s32.totalorder %s30, 7
      %p67 = por %p65, %p66
      %p69 = scmp.ne.s32.totalorder %s52, %s68
      %p70 = scmp.eq.s32.totalorder %s30, 0
      %p71 = por %p69, %p70
      %s72 = ssub.s32 %s31, %s43
      %s73 = ssub.s32 %s32, %s39
      %s74 = sor.u32 %s72, %s73
      %p75 = scmp.eq.s32.totalorder %s74, 0
      %s77 = sadd.s32 %s76, 1
      %s78 = scalar_select %p75, %s76, %s77
      %p81 = pneg %p75
      %p82 = scmp.eq.s32.totalorder %s24, 7
      %p83 = por %p81, %p82
      %p84 = scmp.ne.s32.totalorder %s76, %s79
      %p85 = scmp.eq.s32.totalorder %s24, 0
      %p86 = por %p84, %p85
      %p87 = scmp.ne.s32.totalorder %s76, %s79
      %p88 = scmp.eq.s32.totalorder %s29, 7
      %p89 = por %p87, %p88
      %p90 = scmp.ne.s32.totalorder %s79, %s80
      %p91 = scmp.eq.s32.totalorder %s29, 0
      %p92 = por %p90, %p91
      %p93 = scmp.ne.s32.totalorder %s79, %s80
      %p94 = scmp.eq.s32.totalorder %s30, 7
      %p95 = por %p93, %p94
      %p97 = scmp.ne.s32.totalorder %s80, %s96
      %p98 = scmp.eq.s32.totalorder %s30, 0
      %p99 = por %p97, %p98
      %s101 = sadd.s32 %s100, 1
      %p104 = scmp.eq.s32.totalorder %s24, 7
      %p105 = scmp.ne.s32.totalorder %s100, %s102
      %p106 = scmp.eq.s32.totalorder %s24, 0
      %p107 = por %p105, %p106
      %p108 = scmp.ne.s32.totalorder %s100, %s102
      %p109 = scmp.eq.s32.totalorder %s29, 7
      %p110 = por %p108, %p109
      %p111 = scmp.ne.s32.totalorder %s102, %s103
      %p112 = scmp.eq.s32.totalorder %s29, 0
      %p113 = por %p111, %p112
      %p114 = scmp.ne.s32.totalorder %s102, %s103
      %p115 = scmp.eq.s32.totalorder %s30, 7
      %p116 = por %p114, %p115
      %p118 = scmp.ne.s32.totalorder %s103, %s117
      %p119 = scmp.eq.s32.totalorder %s30, 0
      %p120 = por %p118, %p119
      %s122 = sadd.s32 %s121, 1
      %p125 = scmp.eq.s32.totalorder %s24, 7
      %p126 = scmp.ne.s32.totalorder %s121, %s123
      %p127 = scmp.eq.s32.totalorder %s24, 0
      %p128 = por %p126, %p127
      %p129 = scmp.ne.s32.totalorder %s121, %s123
      %p130 = scmp.eq.s32.totalorder %s29, 7
      %p131 = por %p129, %p130
      %p132 = scmp.ne.s32.totalorder %s123, %s124
      %p133 = scmp.eq.s32.totalorder %s29, 0
      %p134 = por %p132, %p133
      %p135 = scmp.ne.s32.totalorder %s123, %s124
      %p136 = scmp.eq.s32.totalorder %s30, 7
      %p137 = por %p135, %p136
      %p139 = scmp.ne.s32.totalorder %s124, %s138
      %p140 = scmp.eq.s32.totalorder %s30, 0
      %p141 = por %p139, %p140
      %s143 = sadd.s32 %s142, 1
      %p146 = scmp.eq.s32.totalorder %s24, 7
      %p147 = scmp.ne.s32.totalorder %s142, %s144
      %p148 = scmp.eq.s32.totalorder %s24, 0
      %p149 = por %p147, %p148
      %p150 = scmp.ne.s32.totalorder %s142, %s144
      %p151 = scmp.eq.s32.totalorder %s29, 7
      %p152 = por %p150, %p151
      %p153 = scmp.ne.s32.totalorder %s144, %s145
      %p154 = scmp.eq.s32.totalorder %s29, 0
      %p155 = por %p153, %p154
      %p156 = scmp.ne.s32.totalorder %s144, %s145
      %p157 = scmp.eq.s32.totalorder %s30, 7
      %p158 = por %p156, %p157
      %p160 = scmp.ne.s32.totalorder %s145, %s159
      %p161 = scmp.eq.s32.totalorder %s30, 0
      %p162 = por %p160, %p161
      %s164 = sadd.s32 %s163, 1
      %p167 = scmp.eq.s32.totalorder %s24, 7
      %p168 = scmp.ne.s32.totalorder %s163, %s165
      %p169 = scmp.eq.s32.totalorder %s24, 0
      %p170 = por %p168, %p169
      %p171 = scmp.ne.s32.totalorder %s163, %s165
      %p172 = scmp.eq.s32.totalorder %s29, 7
      %p173 = por %p171, %p172
      %p174 = scmp.ne.s32.totalorder %s165, %s166
      %p175 = scmp.eq.s32.totalorder %s29, 0
      %p176 = por %p174, %p175
      %p177 = scmp.ne.s32.totalorder %s165, %s166
      %p178 = scmp.eq.s32.totalorder %s30, 7
      %p179 = por %p177, %p178
      %p181 = scmp.ne.s32.totalorder %s166, %s180
      %p182 = scmp.eq.s32.totalorder %s30, 0
      %p183 = por %p181, %p182
      %s185 = sadd.s32 %s184, 1
      %p188 = scmp.eq.s32.totalorder %s24, 7
      %p189 = scmp.ne.s32.totalorder %s184, %s186
      %p190 = scmp.eq.s32.totalorder %s24, 0
      %p191 = por %p189, %p190
      %p192 = scmp.ne.s32.totalorder %s184, %s186
      %p193 = scmp.eq.s32.totalorder %s29, 7
      %p194 = por %p192, %p193
      %p195 = scmp.ne.s32.totalorder %s186, %s187
      %p196 = scmp.eq.s32.totalorder %s29, 0
      %p197 = por %p195, %p196
      %p198 = scmp.ne.s32.totalorder %s186, %s187
      %p199 = scmp.eq.s32.totalorder %s30, 7
      %p200 = por %p198, %p199
      %p202 = scmp.ne.s32.totalorder %s187, %s201
      %p203 = scmp.eq.s32.totalorder %s30, 0
      %p204 = por %p202, %p203
      %s206 = sadd.s32 %s205, 1
      %p209 = scmp.eq.s32.totalorder %s24, 7
      %p210 = scmp.ne.s32.totalorder %s205, %s207
      %p211 = scmp.eq.s32.totalorder %s24, 0
      %p212 = por %p210, %p211
      %p213 = scmp.ne.s32.totalorder %s205, %s207
      %p214 = scmp.eq.s32.totalorder %s29, 7
      %p215 = por %p213, %p214
      %p216 = scmp.ne.s32.totalorder %s207, %s208
      %p217 = scmp.eq.s32.totalorder %s29, 0
      %p218 = por %p216, %p217
      %p219 = scmp.ne.s32.totalorder %s207, %s208
      %p220 = scmp.eq.s32.totalorder %s30, 7
      %p221 = por %p219, %p220
      %p223 = scmp.ne.s32.totalorder %s208, %s222
      %p224 = scmp.eq.s32.totalorder %s30, 0
      %p225 = por %p223, %p224
      %s226 = ssub.s32 %s31, %s43
      %s227 = ssub.s32 %s32, %s39
      %s228 = sor.u32 %s226, %s227
      %p229 = scmp.eq.s32.totalorder %s228, 0
      %s231 = sadd.s32 %s230, 1
      %s232 = scalar_select %p229, %s230, %s231
      %p235 = pneg %p229
      %p236 = scmp.eq.s32.totalorder %s24, 7
      %p237 = por %p235, %p236
      %p238 = scmp.ne.s32.totalorder %s230, %s233
      %p239 = scmp.eq.s32.totalorder %s24, 0
      %p240 = por %p238, %p239
      %p241 = scmp.ne.s32.totalorder %s230, %s233
      %p242 = scmp.eq.s32.totalorder %s29, 7
      %p243 = por %p241, %p242
      %p244 = scmp.ne.s32.totalorder %s233, %s234
      %p245 = scmp.eq.s32.totalorder %s29, 0
      %p246 = por %p244, %p245
      %p247 = scmp.ne.s32.totalorder %s233, %s234
      %p248 = scmp.eq.s32.totalorder %s30, 7
      %p249 = por %p247, %p248
      %p251 = scmp.ne.s32.totalorder %s234, %s250
      %p252 = scmp.eq.s32.totalorder %s30, 0
      %p253 = por %p251, %p252
      %p254 = scmp.le.s32.totalorder 1, %s24
      %p255 = scmp.lt.s32.totalorder %s24, 9
      %p256 = pnand %p254, %p255
      %p257 = pneg %p256
      // Predicated region
      $region9: #{tpu_custom_call.1} parent=5 // pred_check
        _
      $region10: #{tpu_custom_call.1} parent=5 // pred_check_branch
        %259 = sbr.rel (%p256) target = $region12
      $region11: #{tpu_custom_call.1} parent=5 // pred_region
        %s260 = ssub.s32 %s24, 1
        // Predicated region
        $region13: #{tpu_custom_call.1} parent=11 // pred_check
          %p261 = pneg %p113
        $region14: #{tpu_custom_call.1} parent=11 // pred_check_branch
          %263 = sbr.rel (%p261) target = $region16
        $region15: #{tpu_custom_call.1} parent=11 // pred_region
          %s265 = ssub.s32 2048, 2048
          %266 = vsyncadd [#allocation6], %s265
          %s267 = sshll.u32 [#allocation7], 4
          %s268 = int_to_ptr.vmem [resolvable:$true] %s267
          %273 = dma.hbm_to_vmem [thread:$0]  %s2, 2048, %s268, [#allocation6], 128, 128, 8
        $region16: #{tpu_custom_call.1} parent=11 // pred_fallthru
          _
        // Predicated region
        $region17: #{tpu_custom_call.1} parent=11 // pred_check
          %p274 = pneg %p134
        $region18: #{tpu_custom_call.1} parent=11 // pred_check_branch
          %276 = sbr.rel (%p274) target = $region20
        $region19: #{tpu_custom_call.1} parent=11 // pred_region
          _
        $region20: #{tpu_custom_call.1} parent=11 // pred_fallthru
          _
        // Predicated region
        $region21: #{tpu_custom_call.1} parent=11 // pred_check
          %p277 = pneg %p155
        $region22: #{tpu_custom_call.1} parent=11 // pred_check_branch
          %279 = sbr.rel (%p277) target = $region24
        $region23: #{tpu_custom_call.1} parent=11 // pred_region
          %s281 = ssub.s32 512, 512
          %282 = vsyncadd [#allocation9], %s281
          %s283 = sshll.u32 [#allocation8], 4
          %s284 = int_to_ptr.vmem [resolvable:$true] %s283
          %289 = dma.hbm_to_vmem [thread:$0]  %s4, 512, %s284, [#allocation9], 256, 256, 16
        $region24: #{tpu_custom_call.1} parent=11 // pred_fallthru
          _
        // Predicated region
        $region25: #{tpu_custom_call.1} parent=11 // pred_check
          %p290 = pneg %p176
        $region26: #{tpu_custom_call.1} parent=11 // pred_check_branch
          %292 = sbr.rel (%p290) target = $region28
        $region27: #{tpu_custom_call.1} parent=11 // pred_region
          _
        $region28: #{tpu_custom_call.1} parent=11 // pred_fallthru
          _
        // Predicated region
        $region29: #{tpu_custom_call.1} parent=11 // pred_check
          %p293 = pneg %p197
        $region30: #{tpu_custom_call.1} parent=11 // pred_check_branch
          %295 = sbr.rel (%p293) target = $region32
        $region31: #{tpu_custom_call.1} parent=11 // pred_region
          %s297 = ssub.s32 2048, 2048
          %298 = vsyncadd [#allocation9], %s297
          %s299 = sshll.u32 [#allocation10], 4
          %s300 = int_to_ptr.vmem [resolvable:$true] %s299
          %305 = dma.hbm_to_vmem [thread:$0]  %s6, 2048, %s300, [#allocation9], 64, 64, 4
        $region32: #{tpu_custom_call.1} parent=11 // pred_fallthru
          _
        // Predicated region
        $region33: #{tpu_custom_call.1} parent=11 // pred_check
          %p306 = pneg %p218
        $region34: #{tpu_custom_call.1} parent=11 // pred_check_branch
          %308 = sbr.rel (%p306) target = $region36
        $region35: #{tpu_custom_call.1} parent=11 // pred_region
          _
        $region36: #{tpu_custom_call.1} parent=11 // pred_fallthru
          _
      $region12: #{tpu_custom_call.1} parent=5 // pred_fallthru
        _
      %p309 = scmp.lt.s32.totalorder %s24, 8
      // Predicated region
      $region37: #{tpu_custom_call.1} parent=5 // pred_check
        %p310 = pneg %p309
      $region38: #{tpu_custom_call.1} parent=5 // pred_check_branch
        %312 = sbr.rel (%p310) target = $region40
      $region39: #{tpu_custom_call.1} parent=5 // pred_region
        // Predicated region
        $region41: #{tpu_custom_call.1} parent=39 // pred_check
          %p313 = pneg %p58
        $region42: #{tpu_custom_call.1} parent=39 // pred_check_branch
          %315 = sbr.rel (%p313) target = $region44
        $region43: #{tpu_custom_call.1} parent=39 // pred_region
          %s316 = sand.u32 %s48, 1
          %s317 = scalar_lea.sflag [#allocation3], %s316
          %s318 = sand.u32 %s48, 1
          %s319 = smul.addr %s318, 32
          %s320 = scalar_lea.vmem [#allocation2], %s319
          %s321 = smul.u32 4, %s32
          %s323 = ssub.s32 512, 512
          %324 = vsyncadd %s317, %s323
          %s325 = smul.addr %s321, 2
          %s326 = smul.addr %s31, 32
          %s327 = sadd.s32 %s325, %s326
          %s328 = smul.addr %s327, 64
          %s329 = scalar_lea.hbm %s0, %s328
          %s330 = sshll.u32 %s320, 4
          %s331 = int_to_ptr.vmem [resolvable:$true] %s330
          %336 = dma.hbm_to_vmem [thread:$0]  %s329, 512, %s331, %s317, 64, 64, 4
        $region44: #{tpu_custom_call.1} parent=39 // pred_fallthru
          _
        // Predicated region
        $region45: #{tpu_custom_call.1} parent=39 // pred_check
          %p337 = pneg %p86
        $region46: #{tpu_custom_call.1} parent=39 // pred_check_branch
          %339 = sbr.rel (%p337) target = $region48
        $region47: #{tpu_custom_call.1} parent=39 // pred_region
          %s340 = sand.u32 %s24, 1
          %s341 = scalar_lea.sflag [#allocation6], %s340
          %s342 = sand.u32 %s76, 1
          %s343 = smul.addr %s342, 16
          %s344 = scalar_lea.vmem [#allocation5], %s343
          %s345 = smul.u32 2, %s32
          %s347 = ssub.s32 256, 256
          %348 = vsyncadd %s341, %s347
          %s349 = smul.addr %s345, 2
          %s350 = smul.addr %s31, 16
          %s351 = sadd.s32 %s349, %s350
          %s352 = smul.addr %s351, 64
          %s353 = scalar_lea.hbm %s1, %s352
          %s354 = sshll.u32 %s344, 4
          %s355 = int_to_ptr.vmem [resolvable:$true] %s354
          %360 = dma.hbm_to_vmem [thread:$0]  %s353, 256, %s355, %s341, 64, 64, 4
        $region48: #{tpu_custom_call.1} parent=39 // pred_fallthru
          _
      $region40: #{tpu_custom_call.1} parent=5 // pred_fallthru
        _
      %p361 = scmp.le.s32.totalorder 1, %s24
      %p362 = scmp.lt.s32.totalorder %s24, 9
      %p363 = pnand %p361, %p362
      %p364 = pneg %p363
      // Predicated region
      $region49: #{tpu_custom_call.1} parent=5 // pred_check
        _
      $region50: #{tpu_custom_call.1} parent=5 // pred_check_branch
        %366 = sbr.rel (%p363) target = $region52
      $region51: #{tpu_custom_call.1} parent=5 // pred_region
        %s367 = ssub.s32 %s24, 1
        %s368 = sand.u32 %s51, 1
        %s369 = scalar_lea.sflag [#allocation3], %s368
        %s370 = sand.u32 %s51, 1
        %s371 = smul.addr %s370, 32
        %s372 = scalar_lea.vmem [#allocation2], %s371
        // Predicated region
        $region53: #{tpu_custom_call.1} parent=51 // pred_check
          %p373 = pneg %p64
        $region54: #{tpu_custom_call.1} parent=51 // pred_check_branch
          %375 = sbr.rel (%p373) target = $region56
        $region55: #{tpu_custom_call.1} parent=51 // pred_region
          %376 = dma.done %s369, 512
        $region56: #{tpu_custom_call.1} parent=51 // pred_fallthru
          _
        %s377 = sand.u32 %s29, 1
        %s378 = scalar_lea.sflag [#allocation6], %s377
        %s379 = sand.u32 %s79, 1
        %s380 = smul.addr %s379, 16
        %s381 = scalar_lea.vmem [#allocation5], %s380
        // Predicated region
        $region57: #{tpu_custom_call.1} parent=51 // pred_check
          %p382 = pneg %p92
        $region58: #{tpu_custom_call.1} parent=51 // pred_check_branch
          %384 = sbr.rel (%p382) target = $region60
        $region59: #{tpu_custom_call.1} parent=51 // pred_region
          %385 = dma.done %s378, 256
        $region60: #{tpu_custom_call.1} parent=51 // pred_fallthru
          _
        // Predicated region
        $region61: #{tpu_custom_call.1} parent=51 // pred_check
          %p386 = pneg %p113
        $region62: #{tpu_custom_call.1} parent=51 // pred_check_branch
          %388 = sbr.rel (%p386) target = $region64
        $region63: #{tpu_custom_call.1} parent=51 // pred_region
          %389 = dma.done [#allocation6], 2048
        $region64: #{tpu_custom_call.1} parent=51 // pred_fallthru
          _
        // Predicated region
        $region65: #{tpu_custom_call.1} parent=51 // pred_check
          %p390 = pneg %p155
        $region66: #{tpu_custom_call.1} parent=51 // pred_check_branch
          %392 = sbr.rel (%p390) target = $region68
        $region67: #{tpu_custom_call.1} parent=51 // pred_region
          %393 = dma.done [#allocation9], 512
        $region68: #{tpu_custom_call.1} parent=51 // pred_fallthru
          _
        // Predicated region
        $region69: #{tpu_custom_call.1} parent=51 // pred_check
          %p394 = pneg %p197
        $region70: #{tpu_custom_call.1} parent=51 // pred_check_branch
          %396 = sbr.rel (%p394) target = $region72
        $region71: #{tpu_custom_call.1} parent=51 // pred_region
          %397 = dma.done [#allocation9], 2048
        $region72: #{tpu_custom_call.1} parent=51 // pred_fallthru
          _
        %s398 = sand.u32 %s51, 1
        %s399 = scalar_lea.sflag [#allocation3], %s398
        %s400 = sand.u32 %s51, 1
        %s401 = smul.addr %s400, 32
        %s402 = scalar_lea.vmem [#allocation2], %s401
        %p403 = pneg %p64
        %p404 = pneg %p61
        %s405 = sand.u32 %s29, 1
        %s406 = scalar_lea.sflag [#allocation6], %s405
        %s407 = sand.u32 %s79, 1
        %s408 = smul.addr %s407, 16
        %s409 = scalar_lea.vmem [#allocation5], %s408
        %p410 = pneg %p92
        %p411 = pneg %p89
        %p412 = pneg %p113
        %p413 = pneg %p110
        %p414 = pneg %p134
        %p415 = pneg %p131
        %p416 = pneg %p155
        %p417 = pneg %p152
        %p418 = pneg %p176
        %p419 = pneg %p173
        %p420 = pneg %p197
        %p421 = pneg %p194
        %p422 = pneg %p218
        %p423 = pneg %p215
        %p424 = pneg %p246
        %p425 = pneg %p243
        %s426 = sand.u32 %s233, 1
        %s427 = scalar_lea.sflag [#allocation4], %s426
        %s428 = sand.u32 %s233, 1
        %s429 = smul.addr %s428, 32
        %s430 = scalar_lea.vmem [#allocation11], %s429
        %s431 = smul.u32 4, %s34
        %s432 = smul.u32 2, %s34
        %s433 = smul.u32 4, %s34
        %v435 = vld [vmem:[%s372] sm:$0xf]
        %v436 = vld [vmem:[%s372 + $0x4] sm:$0xf]
        %v437 = vld [vmem:[%s372 + $0x8] sm:$0xf]
        %v438 = vld [vmem:[%s372 + $0xc] sm:$0xf]
        %v439 = vld [vmem:[%s372 + $0x10] sm:$0xf]
        %v440 = vld [vmem:[%s372 + $0x14] sm:$0xf]
        %v441 = vld [vmem:[%s372 + $0x18] sm:$0xf]
        %v442 = vld [vmem:[%s372 + $0x1c] sm:$0xf]
        %v443 = vld [vmem:[%s381] sm:$0xf]
        %v444 = vld [vmem:[%s381 + $0x4] sm:$0xf]
        %s445 = scalar_lea.vmem %s381, 8 [#allocation5]
        %v446 = vld [vmem:[%s445] sm:$0xf]
        %v447 = vld [vmem:[%s445 + $0x4] sm:$0xf]
        %v450 = vunpack.c.l.b16 %v443
        %v451 = vunpack.c.l.b16 %v444
        %v452 = vpack.c.b16 %v451, %v450
        %v462 = vunpack.c.l.b16 %v435
        %v463 = vunpack.c.l.b16 %v436
        %v464 = vunpack.c.l.b16 %v437
        %v465 = vunpack.c.l.b16 %v438
        %v466 = vunpack.c.l.b16 %v439
        %v467 = vunpack.c.l.b16 %v440
        %v468 = vunpack.c.l.b16 %v441
        %v469 = vunpack.c.l.b16 %v442
        %v470 = vpack.c.b16 %v463, %v462
        %v471 = vpack.c.b16 %v465, %v464
        %v472 = vpack.c.b16 %v467, %v466
        %v473 = vpack.c.b16 %v469, %v468
        %v480 = vunpack.c.l.b16 %v446
        %v481 = vunpack.c.l.b16 %v447
        %v482 = vpack.c.b16 %v481, %v480
        %v484 = vld [vmem:[#allocation7] sm:$0xff]
        %v485 = vld [vmem:[#allocation7 + $0x8] sm:$0xff]
        %v486 = vld [vmem:[#allocation7 + $0x10] sm:$0xff]
        %v487 = vld [vmem:[#allocation7 + $0x18] sm:$0xff]
        %v488 = vld [vmem:[#allocation7 + $0x20] sm:$0xff]
        %v489 = vld [vmem:[#allocation7 + $0x28] sm:$0xff]
        %v490 = vld [vmem:[#allocation7 + $0x30] sm:$0xff]
        %v491 = vld [vmem:[#allocation7 + $0x38] sm:$0xff]
        %v492 = vld [vmem:[#allocation7 + $0x40] sm:$0xff]
        %v493 = vld [vmem:[#allocation7 + $0x48] sm:$0xff]
        %v494 = vld [vmem:[#allocation7 + $0x50] sm:$0xff]
        %v495 = vld [vmem:[#allocation7 + $0x58] sm:$0xff]
        %v496 = vld [vmem:[#allocation7 + $0x60] sm:$0xff]
        %v497 = vld [vmem:[#allocation7 + $0x68] sm:$0xff]
        %v498 = vld [vmem:[#allocation7 + $0x70] sm:$0xff]
        %v499 = vld [vmem:[#allocation7 + $0x78] sm:$0xff]
        %v500 = vld [vmem:[%s3] sm:$0x3]
        %v502 = vlaneseq
        %v503 = vshrl.u32 %v502, 7
        %v504 = vsub.s32 0, %v503
        %v505 = vrot.slane %v500, %v504
        %v506 = vlaneseq
        %v507 = vshrl.u32 %v506, 7
        %v508 = vsub.s32 1, %v507
        %v509 = vrot.slane %v500, %v508
        %v528 = vunpack.c.l.b16 %v484
        %v529 = vunpack.c.h.b16 %v484
        %v530 = vunpack.c.l.b16 %v485
        %v531 = vunpack.c.h.b16 %v485
        %v532 = vunpack.c.l.b16 %v486
        %v533 = vunpack.c.h.b16 %v486
        %v534 = vunpack.c.l.b16 %v487
        %v535 = vunpack.c.h.b16 %v487
        %v536 = vunpack.c.l.b16 %v488
        %v537 = vunpack.c.h.b16 %v488
        %v538 = vunpack.c.l.b16 %v489
        %v539 = vunpack.c.h.b16 %v489
        %v540 = vunpack.c.l.b16 %v490
        %v541 = vunpack.c.h.b16 %v490
        %v542 = vunpack.c.l.b16 %v491
        %v543 = vunpack.c.h.b16 %v491
        %v544 = vunpack.c.l.b16 %v492
        %v545 = vunpack.c.h.b16 %v492
        %v546 = vunpack.c.l.b16 %v493
        %v547 = vunpack.c.h.b16 %v493
        %v548 = vunpack.c.l.b16 %v494
        %v549 = vunpack.c.h.b16 %v494
        %v550 = vunpack.c.l.b16 %v495
        %v551 = vunpack.c.h.b16 %v495
        %v552 = vunpack.c.l.b16 %v496
        %v553 = vunpack.c.h.b16 %v496
        %v554 = vunpack.c.l.b16 %v497
        %v555 = vunpack.c.h.b16 %v497
        %v556 = vunpack.c.l.b16 %v498
        %v557 = vunpack.c.h.b16 %v498
        %v558 = vunpack.c.l.b16 %v499
        %v559 = vunpack.c.h.b16 %v499
        %v560 = vpack.c.b16 %v530, %v528
        %v561 = vpack.c.b16 %v531, %v529
        %v562 = vpack.c.b16 %v534, %v532
        %v563 = vpack.c.b16 %v535, %v533
        %v564 = vpack.c.b16 %v538, %v536
        %v565 = vpack.c.b16 %v539, %v537
        %v566 = vpack.c.b16 %v542, %v540
        %v567 = vpack.c.b16 %v543, %v541
        %v568 = vpack.c.b16 %v546, %v544
        %v569 = vpack.c.b16 %v547, %v545
        %v570 = vpack.c.b16 %v550, %v548
        %v571 = vpack.c.b16 %v551, %v549
        %v572 = vpack.c.b16 %v554, %v552
        %v573 = vpack.c.b16 %v555, %v553
        %v574 = vpack.c.b16 %v558, %v556
        %v575 = vpack.c.b16 %v559, %v557
        %592 = vmatprep.subr.bf16.mxu0 %v575
        %593 = vmatpush1.bf16.msra.mxu0 %v574
        %594 = vmatprep.subr.bf16.mxu0 %v573
        %595 = vmatpush1.bf16.msra.mxu0 %v572
        %596 = vmatprep.subr.bf16.mxu0 %v571
        %597 = vmatpush1.bf16.msra.mxu0 %v570
        %598 = vmatprep.subr.bf16.mxu0 %v569
        %599 = vmatpush1.bf16.msra.mxu0 %v568
        %600 = vmatprep.subr.bf16.mxu0 %v567
        %601 = vmatpush1.bf16.msra.mxu0 %v566
        %602 = vmatprep.subr.bf16.mxu0 %v565
        %603 = vmatpush1.bf16.msra.mxu0 %v564
        %604 = vmatprep.subr.bf16.mxu0 %v563
        %605 = vmatpush1.bf16.msra.mxu0 %v562
        %606 = vmatprep.subr.bf16.mxu0 %v561
        %607 = vmatpush1.bf16.msra.mxu0 %v560
        %608 = vmatprep.subr.bf16.mxu0 0
        %609 = vmatpush2.bf16.msra.mxu0 0
        %610 = vmatprep.subr.bf16.mxu0 0
        %611 = vmatpush2.bf16.msra.mxu0 0
        %612 = vmatprep.subr.bf16.mxu0 0
        %613 = vmatpush2.bf16.msra.mxu0 0
        %614 = vmatprep.subr.bf16.mxu0 0
        %615 = vmatpush2.bf16.msra.mxu0 0
        %616 = vmatprep.subr.bf16.mxu0 0
        %617 = vmatpush2.bf16.msra.mxu0 0
        %618 = vmatprep.subr.bf16.mxu0 0
        %619 = vmatpush2.bf16.msra.mxu0 0
        %620 = vmatprep.subr.bf16.mxu0 0
        %621 = vmatpush2.bf16.msra.mxu0 0
        %622 = vmatprep.subr.bf16.mxu0 0
        %623 = vmatpush2.bf16.msra.mxu0 0
        %624 = vmatprep.mubr.bf16.mxu0 0
        %625 = vmatmul.mubr.bf16.gmra.mxu0 %v452
        %v626 = vpop.f32.mrf.mxu0
        %v627 = vadd.f32 %v505, %v626
        %v628 = vpop.f32.mrf.mxu0
        %v629 = vadd.f32 %v509, %v628
        %v630 = vpop.f32.mrf.mxu0
        %v631 = vadd.f32 %v505, %v630
        %v632 = vpop.f32.mrf.mxu0
        %v633 = vadd.f32 %v509, %v632
        %634 = vmatprep.mubr.bf16.mxu0 0
        %635 = vmatmul.mubr.bf16.gmra.mxu0 %v470
        %v636 = vpop.f32.mrf.mxu0
        %v637 = vadd.f32 %v505, %v636
        %v638 = vpop.f32.mrf.mxu0
        %v639 = vadd.f32 %v509, %v638
        %v640 = vpop.f32.mrf.mxu0
        %v641 = vadd.f32 %v505, %v640
        %v642 = vpop.f32.mrf.mxu0
        %v643 = vadd.f32 %v509, %v642
        %644 = vmatprep.mubr.bf16.mxu0 0
        %645 = vmatmul.mubr.bf16.gmra.mxu0 %v471
        %v646 = vpop.f32.mrf.mxu0
        %v647 = vadd.f32 %v505, %v646
        %v648 = vpop.f32.mrf.mxu0
        %v649 = vadd.f32 %v509, %v648
        %v650 = vpop.f32.mrf.mxu0
        %v651 = vadd.f32 %v505, %v650
        %v652 = vpop.f32.mrf.mxu0
        %v653 = vadd.f32 %v509, %v652
        %654 = vmatprep.mubr.bf16.mxu0 0
        %655 = vmatmul.mubr.bf16.gmra.mxu0 %v472
        %v656 = vpop.f32.mrf.mxu0
        %v657 = vadd.f32 %v505, %v656
        %v658 = vpop.f32.mrf.mxu0
        %v659 = vadd.f32 %v509, %v658
        %v660 = vpop.f32.mrf.mxu0
        %v661 = vadd.f32 %v505, %v660
        %v662 = vpop.f32.mrf.mxu0
        %v663 = vadd.f32 %v509, %v662
        %664 = vmatprep.mubr.bf16.mxu0 0
        %665 = vmatmul.mubr.bf16.gmra.mxu0 %v473
        %v666 = vpop.f32.mrf.mxu0
        %v667 = vadd.f32 %v505, %v666
        %v668 = vpop.f32.mrf.mxu0
        %v669 = vadd.f32 %v509, %v668
        %v670 = vpop.f32.mrf.mxu0
        %v671 = vadd.f32 %v505, %v670
        %v672 = vpop.f32.mrf.mxu0
        %v673 = vadd.f32 %v509, %v672
        %674 = vmatprep.mubr.bf16.mxu0 0
        %675 = vmatmul.mubr.bf16.gmra.mxu0 %v482
        %v676 = vpop.f32.mrf.mxu0
        %v677 = vadd.f32 %v505, %v676
        %v678 = vpop.f32.mrf.mxu0
        %v679 = vadd.f32 %v509, %v678
        %v680 = vpop.f32.mrf.mxu0
        %v681 = vadd.f32 %v505, %v680
        %v682 = vpop.f32.mrf.mxu0
        %v683 = vadd.f32 %v509, %v682
        %684 = vdwg.mxu0
        %v685 = vlaneseq
        %v686 = vshrl.u32 %v685, 7
        %v687 = vadd.s32 %v686, 8
        %v688 = vadd.s32 %v686, 16
        %v689 = vadd.s32 %v686, 24
        %v690 = vadd.s32 %v686, 32
        %v691 = vadd.s32 %v686, 40
        %v692 = vadd.s32 %v686, 48
        %v693 = vadd.s32 %v686, 56
        %v694 = vadd.s32 %v686, 64
        %v695 = vadd.s32 %v686, 72
        %v696 = vadd.s32 %v686, 80
        %v697 = vadd.s32 %v686, 88
        %vm698 = vcmp.ge.s32.totalorder %v686, 16
        %vm699 = vcmp.ge.s32.totalorder %v687, 16
        %vm700 = vcmp.ge.s32.totalorder %v688, 16
        %vm701 = vcmp.ge.s32.totalorder %v689, 16
        %vm702 = vcmp.ge.s32.totalorder %v690, 16
        %vm703 = vcmp.ge.s32.totalorder %v691, 16
        %vm704 = vcmp.ge.s32.totalorder %v692, 16
        %vm705 = vcmp.ge.s32.totalorder %v693, 16
        %vm706 = vcmp.ge.s32.totalorder %v694, 16
        %vm707 = vcmp.ge.s32.totalorder %v695, 16
        %vm708 = vcmp.ge.s32.totalorder %v696, 16
        %vm709 = vcmp.ge.s32.totalorder %v697, 16
        %p710 = scmp.gt.s32.totalorder %s34, 0
        %s711 = scalar_select %p710, 1, 0
        %v712 = vstv %s711
        %vm713 = vcmp.eq.s32.totalorder %v712, 1
        %vm714 = vmor %vm698, %vm713
        %vm715 = vmor %vm699, %vm713
        %vm716 = vmor %vm700, %vm713
        %vm717 = vmor %vm701, %vm713
        %vm718 = vmor %vm702, %vm713
        %vm719 = vmor %vm703, %vm713
        %vm720 = vmor %vm704, %vm713
        %vm721 = vmor %vm705, %vm713
        %vm722 = vmor %vm706, %vm713
        %vm723 = vmor %vm707, %vm713
        %vm724 = vmor %vm708, %vm713
        %vm725 = vmor %vm709, %vm713
        %vm726 = vcmp.lt.s32.totalorder %v686, 80
        %vm727 = vcmp.lt.s32.totalorder %v687, 80
        %vm728 = vcmp.lt.s32.totalorder %v688, 80
        %vm729 = vcmp.lt.s32.totalorder %v689, 80
        %vm730 = vcmp.lt.s32.totalorder %v690, 80
        %vm731 = vcmp.lt.s32.totalorder %v691, 80
        %vm732 = vcmp.lt.s32.totalorder %v692, 80
        %vm733 = vcmp.lt.s32.totalorder %v693, 80
        %vm734 = vcmp.lt.s32.totalorder %v694, 80
        %vm735 = vcmp.lt.s32.totalorder %v695, 80
        %vm736 = vcmp.lt.s32.totalorder %v696, 80
        %vm737 = vcmp.lt.s32.totalorder %v697, 80
        %p738 = scmp.lt.s32.totalorder %s34, 3
        %s739 = scalar_select %p738, 1, 0
        %v740 = vstv %s739
        %vm741 = vcmp.eq.s32.totalorder %v740, 1
        %vm742 = vmor %vm726, %vm741
        %vm743 = vmor %vm727, %vm741
        %vm744 = vmor %vm728, %vm741
        %vm745 = vmor %vm729, %vm741
        %vm746 = vmor %vm730, %vm741
        %vm747 = vmor %vm731, %vm741
        %vm748 = vmor %vm732, %vm741
        %vm749 = vmor %vm733, %vm741
        %vm750 = vmor %vm734, %vm741
        %vm751 = vmor %vm735, %vm741
        %vm752 = vmor %vm736, %vm741
        %vm753 = vmor %vm737, %vm741
        %vm754 = vmand %vm714, %vm742
        %vm755 = vmand %vm715, %vm743
        %vm756 = vmand %vm716, %vm744
        %vm757 = vmand %vm717, %vm745
        %vm758 = vmand %vm718, %vm746
        %vm759 = vmand %vm719, %vm747
        %vm760 = vmand %vm720, %vm748
        %vm761 = vmand %vm721, %vm749
        %vm762 = vmand %vm722, %vm750
        %vm763 = vmand %vm723, %vm751
        %vm764 = vmand %vm724, %vm752
        %vm765 = vmand %vm725, %vm753
        %v766 = vsel %vm754, 1, 0
        %v767 = vsel %vm755, 1, 0
        %v768 = vsel %vm756, 1, 0
        %v769 = vsel %vm757, 1, 0
        %v770 = vsel %vm758, 1, 0
        %v771 = vsel %vm759, 1, 0
        %v772 = vsel %vm760, 1, 0
        %v773 = vsel %vm761, 1, 0
        %v774 = vsel %vm762, 1, 0
        %v775 = vsel %vm763, 1, 0
        %v776 = vsel %vm764, 1, 0
        %v777 = vsel %vm765, 1, 0
        %vm778 = vcmp.eq.s32.totalorder %v766, 1
        %vm779 = vcmp.eq.s32.totalorder %v767, 1
        %vm780 = vcmp.eq.s32.totalorder %v768, 1
        %vm781 = vcmp.eq.s32.totalorder %v769, 1
        %vm782 = vcmp.eq.s32.totalorder %v770, 1
        %vm783 = vcmp.eq.s32.totalorder %v771, 1
        %vm784 = vcmp.eq.s32.totalorder %v772, 1
        %vm785 = vcmp.eq.s32.totalorder %v773, 1
        %vm786 = vcmp.eq.s32.totalorder %v774, 1
        %vm787 = vcmp.eq.s32.totalorder %v775, 1
        %vm788 = vcmp.eq.s32.totalorder %v776, 1
        %vm789 = vcmp.eq.s32.totalorder %v777, 1
        %v790 = vsel %vm778, %v627, 0.0
        %v791 = vsel %vm778, %v629, 0.0
        %v792 = vsel %vm779, %v631, 0.0
        %v793 = vsel %vm779, %v633, 0.0
        %v794 = vsel %vm780, %v637, 0.0
        %v795 = vsel %vm780, %v639, 0.0
        %v796 = vsel %vm781, %v641, 0.0
        %v797 = vsel %vm781, %v643, 0.0
        %v798 = vsel %vm782, %v647, 0.0
        %v799 = vsel %vm782, %v649, 0.0
        %v800 = vsel %vm783, %v651, 0.0
        %v801 = vsel %vm783, %v653, 0.0
        %v802 = vsel %vm784, %v657, 0.0
        %v803 = vsel %vm784, %v659, 0.0
        %v804 = vsel %vm785, %v661, 0.0
        %v805 = vsel %vm785, %v663, 0.0
        %v806 = vsel %vm786, %v667, 0.0
        %v807 = vsel %vm786, %v669, 0.0
        %v808 = vsel %vm787, %v671, 0.0
        %v809 = vsel %vm787, %v673, 0.0
        %v810 = vsel %vm788, %v677, 0.0
        %v811 = vsel %vm788, %v679, 0.0
        %v812 = vsel %vm789, %v681, 0.0
        %v813 = vsel %vm789, %v683, 0.0
        %vm814 = vcmp.gt.s32.totalorder %v686, 0
        %vm815 = vcmp.gt.s32.totalorder %v687, 0
        %v816 = vrot.slane %v790, 7
        %v817 = vrot.slane %v791, 7
        %v818 = vrot.slane %v794, 7
        %v819 = vrot.slane %v795, 7
        %v820 = vrot.slane %v798, 7
        %v821 = vrot.slane %v799, 7
        %v822 = vrot.slane %v802, 7
        %v823 = vrot.slane %v803, 7
        %v824 = vrot.slane %v806, 7
        %v825 = vrot.slane %v807, 7
        %v826 = vrot.slane %v810, 7
        %v827 = vrot.slane %v811, 7
        %v828 = vrot.slane %v792, 7
        %v829 = vrot.slane %v793, 7
        %v830 = vrot.slane %v796, 7
        %v831 = vrot.slane %v797, 7
        %v832 = vrot.slane %v800, 7
        %v833 = vrot.slane %v801, 7
        %v834 = vrot.slane %v804, 7
        %v835 = vrot.slane %v805, 7
        %v836 = vrot.slane %v808, 7
        %v837 = vrot.slane %v809, 7
        %v838 = vrot.slane %v812, 7
        %v839 = vrot.slane %v813, 7
        %vm840 = vcmp.lt.s32.totalorder %v686, 1
        %v841 = vsel %vm840, %v816, %v828
        %v842 = vsel %vm840, %v817, %v829
        %v843 = vsel %vm840, %v818, %v830
        %v844 = vsel %vm840, %v819, %v831
        %v845 = vsel %vm840, %v820, %v832
        %v846 = vsel %vm840, %v821, %v833
        %v847 = vsel %vm840, %v822, %v834
        %v848 = vsel %vm840, %v823, %v835
        %v849 = vsel %vm840, %v824, %v836
        %v850 = vsel %vm840, %v825, %v837
        %v851 = vsel %vm840, %v826, %v838
        %v852 = vsel %vm840, %v827, %v839
        %v853 = vsel %vm840, %v828, %v816
        %v854 = vsel %vm840, %v829, %v817
        %v855 = vsel %vm840, %v830, %v818
        %v856 = vsel %vm840, %v831, %v819
        %v857 = vsel %vm840, %v832, %v820
        %v858 = vsel %vm840, %v833, %v821
        %v859 = vsel %vm840, %v834, %v822
        %v860 = vsel %vm840, %v835, %v823
        %v861 = vsel %vm840, %v836, %v824
        %v862 = vsel %vm840, %v837, %v825
        %v863 = vsel %vm840, %v838, %v826
        %v864 = vsel %vm840, %v839, %v827
        %v865 = vsel %vm814, 1, 0
        %v866 = vsel %vm815, 1, 0
        %vm867 = vcmp.eq.s32.totalorder %v865, 1
        %vm868 = vcmp.eq.s32.totalorder %v866, 1
        %v869 = vsel %vm867, %v853, 0.0
        %v870 = vsel %vm867, %v854, 0.0
        %v871 = vsel %vm868, %v841, 0.0
        %v872 = vsel %vm868, %v842, 0.0
        %v873 = vsel %vm867, %v855, 0.0
        %v874 = vsel %vm867, %v856, 0.0
        %v875 = vsel %vm868, %v843, 0.0
        %v876 = vsel %vm868, %v844, 0.0
        %v877 = vsel %vm867, %v857, 0.0
        %v878 = vsel %vm867, %v858, 0.0
        %v879 = vsel %vm868, %v845, 0.0
        %v880 = vsel %vm868, %v846, 0.0
        %v881 = vsel %vm867, %v859, 0.0
        %v882 = vsel %vm867, %v860, 0.0
        %v883 = vsel %vm868, %v847, 0.0
        %v884 = vsel %vm868, %v848, 0.0
        %v885 = vsel %vm867, %v861, 0.0
        %v886 = vsel %vm867, %v862, 0.0
        %v887 = vsel %vm868, %v849, 0.0
        %v888 = vsel %vm868, %v850, 0.0
        %v889 = vsel %vm867, %v863, 0.0
        %v890 = vsel %vm867, %v864, 0.0
        %v891 = vsel %vm868, %v851, 0.0
        %v892 = vsel %vm868, %v852, 0.0
        %vm893 = vcmp.lt.s32.totalorder %v686, 15
        %vm894 = vcmp.lt.s32.totalorder %v687, 15
        %v895 = vrot.slane %v790, 1
        %v896 = vrot.slane %v791, 1
        %v897 = vrot.slane %v794, 1
        %v898 = vrot.slane %v795, 1
        %v899 = vrot.slane %v798, 1
        %v900 = vrot.slane %v799, 1
        %v901 = vrot.slane %v802, 1
        %v902 = vrot.slane %v803, 1
        %v903 = vrot.slane %v806, 1
        %v904 = vrot.slane %v807, 1
        %v905 = vrot.slane %v810, 1
        %v906 = vrot.slane %v811, 1
        %v907 = vrot.slane %v792, 1
        %v908 = vrot.slane %v793, 1
        %v909 = vrot.slane %v796, 1
        %v910 = vrot.slane %v797, 1
        %v911 = vrot.slane %v800, 1
        %v912 = vrot.slane %v801, 1
        %v913 = vrot.slane %v804, 1
        %v914 = vrot.slane %v805, 1
        %v915 = vrot.slane %v808, 1
        %v916 = vrot.slane %v809, 1
        %v917 = vrot.slane %v812, 1
        %v918 = vrot.slane %v813, 1
        %vm919 = vcmp.lt.s32.totalorder %v686, 7
        %v920 = vsel %vm919, %v895, %v907
        %v921 = vsel %vm919, %v896, %v908
        %v922 = vsel %vm919, %v897, %v909
        %v923 = vsel %vm919, %v898, %v910
        %v924 = vsel %vm919, %v899, %v911
        %v925 = vsel %vm919, %v900, %v912
        %v926 = vsel %vm919, %v901, %v913
        %v927 = vsel %vm919, %v902, %v914
        %v928 = vsel %vm919, %v903, %v915
        %v929 = vsel %vm919, %v904, %v916
        %v930 = vsel %vm919, %v905, %v917
        %v931 = vsel %vm919, %v906, %v918
        %v932 = vsel %vm919, %v907, %v895
        %v933 = vsel %vm919, %v908, %v896
        %v934 = vsel %vm919, %v909, %v897
        %v935 = vsel %vm919, %v910, %v898
        %v936 = vsel %vm919, %v911, %v899
        %v937 = vsel %vm919, %v912, %v900
        %v938 = vsel %vm919, %v913, %v901
        %v939 = vsel %vm919, %v914, %v902
        %v940 = vsel %vm919, %v915, %v903
        %v941 = vsel %vm919, %v916, %v904
        %v942 = vsel %vm919, %v917, %v905
        %v943 = vsel %vm919, %v918, %v906
        %v944 = vsel %vm893, 1, 0
        %v945 = vsel %vm894, 1, 0
        %vm946 = vcmp.eq.s32.totalorder %v944, 1
        %vm947 = vcmp.eq.s32.totalorder %v945, 1
        %v948 = vsel %vm946, %v920, 0.0
        %v949 = vsel %vm946, %v921, 0.0
        %v950 = vsel %vm947, %v932, 0.0
        %v951 = vsel %vm947, %v933, 0.0
        %v952 = vsel %vm946, %v922, 0.0
        %v953 = vsel %vm946, %v923, 0.0
        %v954 = vsel %vm947, %v934, 0.0
        %v955 = vsel %vm947, %v935, 0.0
        %v956 = vsel %vm946, %v924, 0.0
        %v957 = vsel %vm946, %v925, 0.0
        %v958 = vsel %vm947, %v936, 0.0
        %v959 = vsel %vm947, %v937, 0.0
        %v960 = vsel %vm946, %v926, 0.0
        %v961 = vsel %vm946, %v927, 0.0
        %v962 = vsel %vm947, %v938, 0.0
        %v963 = vsel %vm947, %v939, 0.0
        %v964 = vsel %vm946, %v928, 0.0
        %v965 = vsel %vm946, %v929, 0.0
        %v966 = vsel %vm947, %v940, 0.0
        %v967 = vsel %vm947, %v941, 0.0
        %v968 = vsel %vm946, %v930, 0.0
        %v969 = vsel %vm946, %v931, 0.0
        %v970 = vsel %vm947, %v942, 0.0
        %v971 = vsel %vm947, %v943, 0.0
        %v972 = vld [vmem:[#allocation8] sm:$0xff]
        %v973 = vld [vmem:[#allocation8 + $0x8] sm:$0xff]
        %v974 = vld [vmem:[#allocation8 + $0x10] sm:$0x1]
        %v975 = vld [vmem:[#allocation8 + $0x18] sm:$0x1]
        %v976 = vlaneseq
        %v977 = vshrl.u32 %v976, 7
        %v978 = vsub.s32 0, %v977
        %v979 = vrot.slane %v972, %v978
        %v980 = vlaneseq
        %v981 = vshrl.u32 %v980, 7
        %v982 = vsub.s32 0, %v981
        %v983 = vrot.slane %v973, %v982
        %v984 = vmul.f32 %v869, %v979
        %v985 = vmul.f32 %v870, %v983
        %v986 = vmul.f32 %v871, %v979
        %v987 = vmul.f32 %v872, %v983
        %v988 = vmul.f32 %v873, %v979
        %v989 = vmul.f32 %v874, %v983
        %v990 = vmul.f32 %v875, %v979
        %v991 = vmul.f32 %v876, %v983
        %v992 = vmul.f32 %v877, %v979
        %v993 = vmul.f32 %v878, %v983
        %v994 = vmul.f32 %v879, %v979
        %v995 = vmul.f32 %v880, %v983
        %v996 = vmul.f32 %v881, %v979
        %v997 = vmul.f32 %v882, %v983
        %v998 = vmul.f32 %v883, %v979
        %v999 = vmul.f32 %v884, %v983
        %v1000 = vadd.f32 %v984, 0.0
        %v1001 = vadd.f32 %v985, 0.0
        %v1002 = vadd.f32 %v986, 0.0
        %v1003 = vadd.f32 %v987, 0.0
        %v1004 = vadd.f32 %v988, 0.0
        %v1005 = vadd.f32 %v989, 0.0
        %v1006 = vadd.f32 %v990, 0.0
        %v1007 = vadd.f32 %v991, 0.0
        %v1008 = vadd.f32 %v992, 0.0
        %v1009 = vadd.f32 %v993, 0.0
        %v1010 = vadd.f32 %v994, 0.0
        %v1011 = vadd.f32 %v995, 0.0
        %v1012 = vadd.f32 %v996, 0.0
        %v1013 = vadd.f32 %v997, 0.0
        %v1014 = vadd.f32 %v998, 0.0
        %v1015 = vadd.f32 %v999, 0.0
        %v1016 = vlaneseq
        %v1017 = vshrl.u32 %v1016, 7
        %v1018 = vsub.s32 1, %v1017
        %v1019 = vrot.slane %v972, %v1018
        %v1020 = vlaneseq
        %v1021 = vshrl.u32 %v1020, 7
        %v1022 = vsub.s32 1, %v1021
        %v1023 = vrot.slane %v973, %v1022
        %v1024 = vmul.f32 %v790, %v1019
        %v1025 = vmul.f32 %v791, %v1023
        %v1026 = vmul.f32 %v792, %v1019
        %v1027 = vmul.f32 %v793, %v1023
        %v1028 = vmul.f32 %v794, %v1019
        %v1029 = vmul.f32 %v795, %v1023
        %v1030 = vmul.f32 %v796, %v1019
        %v1031 = vmul.f32 %v797, %v1023
        %v1032 = vmul.f32 %v798, %v1019
        %v1033 = vmul.f32 %v799, %v1023
        %v1034 = vmul.f32 %v800, %v1019
        %v1035 = vmul.f32 %v801, %v1023
        %v1036 = vmul.f32 %v802, %v1019
        %v1037 = vmul.f32 %v803, %v1023
        %v1038 = vmul.f32 %v804, %v1019
        %v1039 = vmul.f32 %v805, %v1023
        %v1040 = vadd.f32 %v1000, %v1024
        %v1041 = vadd.f32 %v1001, %v1025
        %v1042 = vadd.f32 %v1002, %v1026
        %v1043 = vadd.f32 %v1003, %v1027
        %v1044 = vadd.f32 %v1004, %v1028
        %v1045 = vadd.f32 %v1005, %v1029
        %v1046 = vadd.f32 %v1006, %v1030
        %v1047 = vadd.f32 %v1007, %v1031
        %v1048 = vadd.f32 %v1008, %v1032
        %v1049 = vadd.f32 %v1009, %v1033
        %v1050 = vadd.f32 %v1010, %v1034
        %v1051 = vadd.f32 %v1011, %v1035
        %v1052 = vadd.f32 %v1012, %v1036
        %v1053 = vadd.f32 %v1013, %v1037
        %v1054 = vadd.f32 %v1014, %v1038
        %v1055 = vadd.f32 %v1015, %v1039
        %v1056 = vlaneseq
        %v1057 = vshrl.u32 %v1056, 7
        %v1058 = vsub.s32 2, %v1057
        %v1059 = vrot.slane %v972, %v1058
        %v1060 = vlaneseq
        %v1061 = vshrl.u32 %v1060, 7
        %v1062 = vsub.s32 2, %v1061
        %v1063 = vrot.slane %v973, %v1062
        %v1064 = vmul.f32 %v948, %v1059
        %v1065 = vmul.f32 %v949, %v1063
        %v1066 = vmul.f32 %v950, %v1059
        %v1067 = vmul.f32 %v951, %v1063
        %v1068 = vmul.f32 %v952, %v1059
        %v1069 = vmul.f32 %v953, %v1063
        %v1070 = vmul.f32 %v954, %v1059
        %v1071 = vmul.f32 %v955, %v1063
        %v1072 = vmul.f32 %v956, %v1059
        %v1073 = vmul.f32 %v957, %v1063
        %v1074 = vmul.f32 %v958, %v1059
        %v1075 = vmul.f32 %v959, %v1063
        %v1076 = vmul.f32 %v960, %v1059
        %v1077 = vmul.f32 %v961, %v1063
        %v1078 = vmul.f32 %v962, %v1059
        %v1079 = vmul.f32 %v963, %v1063
        %v1080 = vadd.f32 %v1040, %v1064
        %v1081 = vadd.f32 %v1041, %v1065
        %v1082 = vadd.f32 %v1042, %v1066
        %v1083 = vadd.f32 %v1043, %v1067
        %v1084 = vadd.f32 %v1044, %v1068
        %v1085 = vadd.f32 %v1045, %v1069
        %v1086 = vadd.f32 %v1046, %v1070
        %v1087 = vadd.f32 %v1047, %v1071
        %v1088 = vadd.f32 %v1048, %v1072
        %v1089 = vadd.f32 %v1049, %v1073
        %v1090 = vadd.f32 %v1050, %v1074
        %v1091 = vadd.f32 %v1051, %v1075
        %v1092 = vadd.f32 %v1052, %v1076
        %v1093 = vadd.f32 %v1053, %v1077
        %v1094 = vadd.f32 %v1054, %v1078
        %v1095 = vadd.f32 %v1055, %v1079
        %v1096 = vlaneseq
        %v1097 = vshrl.u32 %v1096, 7
        %v1098 = vsub.s32 3, %v1097
        %v1099 = vrot.slane %v972, %v1098
        %v1100 = vlaneseq
        %v1101 = vshrl.u32 %v1100, 7
        %v1102 = vsub.s32 3, %v1101
        %v1103 = vrot.slane %v973, %v1102
        %v1104 = vmul.f32 %v873, %v1099
        %v1105 = vmul.f32 %v874, %v1103
        %v1106 = vmul.f32 %v875, %v1099
        %v1107 = vmul.f32 %v876, %v1103
        %v1108 = vmul.f32 %v877, %v1099
        %v1109 = vmul.f32 %v878, %v1103
        %v1110 = vmul.f32 %v879, %v1099
        %v1111 = vmul.f32 %v880, %v1103
        %v1112 = vmul.f32 %v881, %v1099
        %v1113 = vmul.f32 %v882, %v1103
        %v1114 = vmul.f32 %v883, %v1099
        %v1115 = vmul.f32 %v884, %v1103
        %v1116 = vmul.f32 %v885, %v1099
        %v1117 = vmul.f32 %v886, %v1103
        %v1118 = vmul.f32 %v887, %v1099
        %v1119 = vmul.f32 %v888, %v1103
        %v1120 = vadd.f32 %v1080, %v1104
        %v1121 = vadd.f32 %v1081, %v1105
        %v1122 = vadd.f32 %v1082, %v1106
        %v1123 = vadd.f32 %v1083, %v1107
        %v1124 = vadd.f32 %v1084, %v1108
        %v1125 = vadd.f32 %v1085, %v1109
        %v1126 = vadd.f32 %v1086, %v1110
        %v1127 = vadd.f32 %v1087, %v1111
        %v1128 = vadd.f32 %v1088, %v1112
        %v1129 = vadd.f32 %v1089, %v1113
        %v1130 = vadd.f32 %v1090, %v1114
        %v1131 = vadd.f32 %v1091, %v1115
        %v1132 = vadd.f32 %v1092, %v1116
        %v1133 = vadd.f32 %v1093, %v1117
        %v1134 = vadd.f32 %v1094, %v1118
        %v1135 = vadd.f32 %v1095, %v1119
        %v1136 = vlaneseq
        %v1137 = vshrl.u32 %v1136, 7
        %v1138 = vsub.s32 4, %v1137
        %v1139 = vrot.slane %v972, %v1138
        %v1140 = vlaneseq
        %v1141 = vshrl.u32 %v1140, 7
        %v1142 = vsub.s32 4, %v1141
        %v1143 = vrot.slane %v973, %v1142
        %v1144 = vmul.f32 %v794, %v1139
        %v1145 = vmul.f32 %v795, %v1143
        %v1146 = vmul.f32 %v796, %v1139
        %v1147 = vmul.f32 %v797, %v1143
        %v1148 = vmul.f32 %v798, %v1139
        %v1149 = vmul.f32 %v799, %v1143
        %v1150 = vmul.f32 %v800, %v1139
        %v1151 = vmul.f32 %v801, %v1143
        %v1152 = vmul.f32 %v802, %v1139
        %v1153 = vmul.f32 %v803, %v1143
        %v1154 = vmul.f32 %v804, %v1139
        %v1155 = vmul.f32 %v805, %v1143
        %v1156 = vmul.f32 %v806, %v1139
        %v1157 = vmul.f32 %v807, %v1143
        %v1158 = vmul.f32 %v808, %v1139
        %v1159 = vmul.f32 %v809, %v1143
        %v1160 = vadd.f32 %v1120, %v1144
        %v1161 = vadd.f32 %v1121, %v1145
        %v1162 = vadd.f32 %v1122, %v1146
        %v1163 = vadd.f32 %v1123, %v1147
        %v1164 = vadd.f32 %v1124, %v1148
        %v1165 = vadd.f32 %v1125, %v1149
        %v1166 = vadd.f32 %v1126, %v1150
        %v1167 = vadd.f32 %v1127, %v1151
        %v1168 = vadd.f32 %v1128, %v1152
        %v1169 = vadd.f32 %v1129, %v1153
        %v1170 = vadd.f32 %v1130, %v1154
        %v1171 = vadd.f32 %v1131, %v1155
        %v1172 = vadd.f32 %v1132, %v1156
        %v1173 = vadd.f32 %v1133, %v1157
        %v1174 = vadd.f32 %v1134, %v1158
        %v1175 = vadd.f32 %v1135, %v1159
        %v1176 = vlaneseq
        %v1177 = vshrl.u32 %v1176, 7
        %v1178 = vsub.s32 5, %v1177
        %v1179 = vrot.slane %v972, %v1178
        %v1180 = vlaneseq
        %v1181 = vshrl.u32 %v1180, 7
        %v1182 = vsub.s32 5, %v1181
        %v1183 = vrot.slane %v973, %v1182
        %v1184 = vmul.f32 %v952, %v1179
        %v1185 = vmul.f32 %v953, %v1183
        %v1186 = vmul.f32 %v954, %v1179
        %v1187 = vmul.f32 %v955, %v1183
        %v1188 = vmul.f32 %v956, %v1179
        %v1189 = vmul.f32 %v957, %v1183
        %v1190 = vmul.f32 %v958, %v1179
        %v1191 = vmul.f32 %v959, %v1183
        %v1192 = vmul.f32 %v960, %v1179
        %v1193 = vmul.f32 %v961, %v1183
        %v1194 = vmul.f32 %v962, %v1179
        %v1195 = vmul.f32 %v963, %v1183
        %v1196 = vmul.f32 %v964, %v1179
        %v1197 = vmul.f32 %v965, %v1183
        %v1198 = vmul.f32 %v966, %v1179
        %v1199 = vmul.f32 %v967, %v1183
        %v1200 = vadd.f32 %v1160, %v1184
        %v1201 = vadd.f32 %v1161, %v1185
        %v1202 = vadd.f32 %v1162, %v1186
        %v1203 = vadd.f32 %v1163, %v1187
        %v1204 = vadd.f32 %v1164, %v1188
        %v1205 = vadd.f32 %v1165, %v1189
        %v1206 = vadd.f32 %v1166, %v1190
        %v1207 = vadd.f32 %v1167, %v1191
        %v1208 = vadd.f32 %v1168, %v1192
        %v1209 = vadd.f32 %v1169, %v1193
        %v1210 = vadd.f32 %v1170, %v1194
        %v1211 = vadd.f32 %v1171, %v1195
        %v1212 = vadd.f32 %v1172, %v1196
        %v1213 = vadd.f32 %v1173, %v1197
        %v1214 = vadd.f32 %v1174, %v1198
        %v1215 = vadd.f32 %v1175, %v1199
        %v1216 = vlaneseq
        %v1217 = vshrl.u32 %v1216, 7
        %v1218 = vsub.s32 6, %v1217
        %v1219 = vrot.slane %v972, %v1218
        %v1220 = vlaneseq
        %v1221 = vshrl.u32 %v1220, 7
        %v1222 = vsub.s32 6, %v1221
        %v1223 = vrot.slane %v973, %v1222
        %v1224 = vmul.f32 %v877, %v1219
        %v1225 = vmul.f32 %v878, %v1223
        %v1226 = vmul.f32 %v879, %v1219
        %v1227 = vmul.f32 %v880, %v1223
        %v1228 = vmul.f32 %v881, %v1219
        %v1229 = vmul.f32 %v882, %v1223
        %v1230 = vmul.f32 %v883, %v1219
        %v1231 = vmul.f32 %v884, %v1223
        %v1232 = vmul.f32 %v885, %v1219
        %v1233 = vmul.f32 %v886, %v1223
        %v1234 = vmul.f32 %v887, %v1219
        %v1235 = vmul.f32 %v888, %v1223
        %v1236 = vmul.f32 %v889, %v1219
        %v1237 = vmul.f32 %v890, %v1223
        %v1238 = vmul.f32 %v891, %v1219
        %v1239 = vmul.f32 %v892, %v1223
        %v1240 = vadd.f32 %v1200, %v1224
        %v1241 = vadd.f32 %v1201, %v1225
        %v1242 = vadd.f32 %v1202, %v1226
        %v1243 = vadd.f32 %v1203, %v1227
        %v1244 = vadd.f32 %v1204, %v1228
        %v1245 = vadd.f32 %v1205, %v1229
        %v1246 = vadd.f32 %v1206, %v1230
        %v1247 = vadd.f32 %v1207, %v1231
        %v1248 = vadd.f32 %v1208, %v1232
        %v1249 = vadd.f32 %v1209, %v1233
        %v1250 = vadd.f32 %v1210, %v1234
        %v1251 = vadd.f32 %v1211, %v1235
        %v1252 = vadd.f32 %v1212, %v1236
        %v1253 = vadd.f32 %v1213, %v1237
        %v1254 = vadd.f32 %v1214, %v1238
        %v1255 = vadd.f32 %v1215, %v1239
        %v1256 = vlaneseq
        %v1257 = vshrl.u32 %v1256, 7
        %v1258 = vsub.s32 7, %v1257
        %v1259 = vrot.slane %v972, %v1258
        %v1260 = vlaneseq
        %v1261 = vshrl.u32 %v1260, 7
        %v1262 = vsub.s32 7, %v1261
        %v1263 = vrot.slane %v973, %v1262
        %v1264 = vmul.f32 %v798, %v1259
        %v1265 = vmul.f32 %v799, %v1263
        %v1266 = vmul.f32 %v800, %v1259
        %v1267 = vmul.f32 %v801, %v1263
        %v1268 = vmul.f32 %v802, %v1259
        %v1269 = vmul.f32 %v803, %v1263
        %v1270 = vmul.f32 %v804, %v1259
        %v1271 = vmul.f32 %v805, %v1263
        %v1272 = vmul.f32 %v806, %v1259
        %v1273 = vmul.f32 %v807, %v1263
        %v1274 = vmul.f32 %v808, %v1259
        %v1275 = vmul.f32 %v809, %v1263
        %v1276 = vmul.f32 %v810, %v1259
        %v1277 = vmul.f32 %v811, %v1263
        %v1278 = vmul.f32 %v812, %v1259
        %v1279 = vmul.f32 %v813, %v1263
        %v1280 = vadd.f32 %v1240, %v1264
        %v1281 = vadd.f32 %v1241, %v1265
        %v1282 = vadd.f32 %v1242, %v1266
        %v1283 = vadd.f32 %v1243, %v1267
        %v1284 = vadd.f32 %v1244, %v1268
        %v1285 = vadd.f32 %v1245, %v1269
        %v1286 = vadd.f32 %v1246, %v1270
        %v1287 = vadd.f32 %v1247, %v1271
        %v1288 = vadd.f32 %v1248, %v1272
        %v1289 = vadd.f32 %v1249, %v1273
        %v1290 = vadd.f32 %v1250, %v1274
        %v1291 = vadd.f32 %v1251, %v1275
        %v1292 = vadd.f32 %v1252, %v1276
        %v1293 = vadd.f32 %v1253, %v1277
        %v1294 = vadd.f32 %v1254, %v1278
        %v1295 = vadd.f32 %v1255, %v1279
        %v1296 = vlaneseq
        %v1297 = vshrl.u32 %v1296, 7
        %v1298 = vsub.s32 0, %v1297
        %v1299 = vrot.slane %v974, %v1298
        %v1300 = vlaneseq
        %v1301 = vshrl.u32 %v1300, 7
        %v1302 = vsub.s32 0, %v1301
        %v1303 = vrot.slane %v975, %v1302
        %v1304 = vmul.f32 %v956, %v1299
        %v1305 = vmul.f32 %v957, %v1303
        %v1306 = vmul.f32 %v958, %v1299
        %v1307 = vmul.f32 %v959, %v1303
        %v1308 = vmul.f32 %v960, %v1299
        %v1309 = vmul.f32 %v961, %v1303
        %v1310 = vmul.f32 %v962, %v1299
        %v1311 = vmul.f32 %v963, %v1303
        %v1312 = vmul.f32 %v964, %v1299
        %v1313 = vmul.f32 %v965, %v1303
        %v1314 = vmul.f32 %v966, %v1299
        %v1315 = vmul.f32 %v967, %v1303
        %v1316 = vmul.f32 %v968, %v1299
        %v1317 = vmul.f32 %v969, %v1303
        %v1318 = vmul.f32 %v970, %v1299
        %v1319 = vmul.f32 %v971, %v1303
        %v1320 = vadd.f32 %v1280, %v1304
        %v1321 = vadd.f32 %v1281, %v1305
        %v1322 = vadd.f32 %v1282, %v1306
        %v1323 = vadd.f32 %v1283, %v1307
        %v1324 = vadd.f32 %v1284, %v1308
        %v1325 = vadd.f32 %v1285, %v1309
        %v1326 = vadd.f32 %v1286, %v1310
        %v1327 = vadd.f32 %v1287, %v1311
        %v1328 = vadd.f32 %v1288, %v1312
        %v1329 = vadd.f32 %v1289, %v1313
        %v1330 = vadd.f32 %v1290, %v1314
        %v1331 = vadd.f32 %v1291, %v1315
        %v1332 = vadd.f32 %v1292, %v1316
        %v1333 = vadd.f32 %v1293, %v1317
        %v1334 = vadd.f32 %v1294, %v1318
        %v1335 = vadd.f32 %v1295, %v1319
        %v1336 = vld [vmem:[%s5] sm:$0x3]
        %v1338 = vlaneseq
        %v1339 = vshrl.u32 %v1338, 7
        %v1340 = vsub.s32 0, %v1339
        %v1341 = vrot.slane %v1336, %v1340
        %v1342 = vlaneseq
        %v1343 = vshrl.u32 %v1342, 7
        %v1344 = vsub.s32 1, %v1343
        %v1345 = vrot.slane %v1336, %v1344
        %v1348 = vadd.f32 %v1320, %v1341
        %v1349 = vadd.f32 %v1321, %v1345
        %v1350 = vadd.f32 %v1322, %v1341
        %v1351 = vadd.f32 %v1323, %v1345
        %v1352 = vadd.f32 %v1324, %v1341
        %v1353 = vadd.f32 %v1325, %v1345
        %v1354 = vadd.f32 %v1326, %v1341
        %v1355 = vadd.f32 %v1327, %v1345
        %v1356 = vadd.f32 %v1328, %v1341
        %v1357 = vadd.f32 %v1329, %v1345
        %v1358 = vadd.f32 %v1330, %v1341
        %v1359 = vadd.f32 %v1331, %v1345
        %v1360 = vadd.f32 %v1332, %v1341
        %v1361 = vadd.f32 %v1333, %v1345
        %v1362 = vadd.f32 %v1334, %v1341
        %v1363 = vadd.f32 %v1335, %v1345
        %v1364 = vmul.f32 %v1348, 0.5
        %v1365 = vmul.f32 %v1349, 0.5
        %v1366 = vmul.f32 %v1350, 0.5
        %v1367 = vmul.f32 %v1351, 0.5
        %v1368 = vmul.f32 %v1352, 0.5
        %v1369 = vmul.f32 %v1353, 0.5
        %v1370 = vmul.f32 %v1354, 0.5
        %v1371 = vmul.f32 %v1355, 0.5
        %v1372 = vmul.f32 %v1356, 0.5
        %v1373 = vmul.f32 %v1357, 0.5
        %v1374 = vmul.f32 %v1358, 0.5
        %v1375 = vmul.f32 %v1359, 0.5
        %v1376 = vmul.f32 %v1360, 0.5
        %v1377 = vmul.f32 %v1361, 0.5
        %v1378 = vmul.f32 %v1362, 0.5
        %v1379 = vmul.f32 %v1363, 0.5
        %v1380 = vmul.f32 %v1348, 0.70710677
        %v1381 = vmul.f32 %v1349, 0.70710677
        %v1382 = vmul.f32 %v1350, 0.70710677
        %v1383 = vmul.f32 %v1351, 0.70710677
        %v1384 = vmul.f32 %v1352, 0.70710677
        %v1385 = vmul.f32 %v1353, 0.70710677
        %v1386 = vmul.f32 %v1354, 0.70710677
        %v1387 = vmul.f32 %v1355, 0.70710677
        %v1388 = vmul.f32 %v1356, 0.70710677
        %v1389 = vmul.f32 %v1357, 0.70710677
        %v1390 = vmul.f32 %v1358, 0.70710677
        %v1391 = vmul.f32 %v1359, 0.70710677
        %v1392 = vmul.f32 %v1360, 0.70710677
        %v1393 = vmul.f32 %v1361, 0.70710677
        %v1394 = vmul.f32 %v1362, 0.70710677
        %v1395 = vmul.f32 %v1363, 0.70710677
        %vm1396 = vcmp.lt.f32.partialorder %v1380, 0.0
        %vm1397 = vcmp.lt.f32.partialorder %v1381, 0.0
        %vm1398 = vcmp.lt.f32.partialorder %v1382, 0.0
        %vm1399 = vcmp.lt.f32.partialorder %v1383, 0.0
        %vm1400 = vcmp.lt.f32.partialorder %v1384, 0.0
        %vm1401 = vcmp.lt.f32.partialorder %v1385, 0.0
        %vm1402 = vcmp.lt.f32.partialorder %v1386, 0.0
        %vm1403 = vcmp.lt.f32.partialorder %v1387, 0.0
        %vm1404 = vcmp.lt.f32.partialorder %v1388, 0.0
        %vm1405 = vcmp.lt.f32.partialorder %v1389, 0.0
        %vm1406 = vcmp.lt.f32.partialorder %v1390, 0.0
        %vm1407 = vcmp.lt.f32.partialorder %v1391, 0.0
        %vm1408 = vcmp.lt.f32.partialorder %v1392, 0.0
        %vm1409 = vcmp.lt.f32.partialorder %v1393, 0.0
        %vm1410 = vcmp.lt.f32.partialorder %v1394, 0.0
        %vm1411 = vcmp.lt.f32.partialorder %v1395, 0.0
        %v1412 = vsel %vm1396, -1.0, 1.0
        %v1413 = vsel %vm1397, -1.0, 1.0
        %v1414 = vsel %vm1398, -1.0, 1.0
        %v1415 = vsel %vm1399, -1.0, 1.0
        %v1416 = vsel %vm1400, -1.0, 1.0
        %v1417 = vsel %vm1401, -1.0, 1.0
        %v1418 = vsel %vm1402, -1.0, 1.0
        %v1419 = vsel %vm1403, -1.0, 1.0
        %v1420 = vsel %vm1404, -1.0, 1.0
        %v1421 = vsel %vm1405, -1.0, 1.0
        %v1422 = vsel %vm1406, -1.0, 1.0
        %v1423 = vsel %vm1407, -1.0, 1.0
        %v1424 = vsel %vm1408, -1.0, 1.0
        %v1425 = vsel %vm1409, -1.0, 1.0
        %v1426 = vsel %vm1410, -1.0, 1.0
        %v1427 = vsel %vm1411, -1.0, 1.0
        %v1428 = vand.u32 2147483647, %v1380
        %v1429 = vand.u32 2147483647, %v1381
        %v1430 = vand.u32 2147483647, %v1382
        %v1431 = vand.u32 2147483647, %v1383
        %v1432 = vand.u32 2147483647, %v1384
        %v1433 = vand.u32 2147483647, %v1385
        %v1434 = vand.u32 2147483647, %v1386
        %v1435 = vand.u32 2147483647, %v1387
        %v1436 = vand.u32 2147483647, %v1388
        %v1437 = vand.u32 2147483647, %v1389
        %v1438 = vand.u32 2147483647, %v1390
        %v1439 = vand.u32 2147483647, %v1391
        %v1440 = vand.u32 2147483647, %v1392
        %v1441 = vand.u32 2147483647, %v1393
        %v1442 = vand.u32 2147483647, %v1394
        %v1443 = vand.u32 2147483647, %v1395
        %v1444 = vmul.f32 %v1428, 0.3275911
        %v1445 = vmul.f32 %v1429, 0.3275911
        %v1446 = vmul.f32 %v1430, 0.3275911
        %v1447 = vmul.f32 %v1431, 0.3275911
        %v1448 = vmul.f32 %v1432, 0.3275911
        %v1449 = vmul.f32 %v1433, 0.3275911
        %v1450 = vmul.f32 %v1434, 0.3275911
        %v1451 = vmul.f32 %v1435, 0.3275911
        %v1452 = vmul.f32 %v1436, 0.3275911
        %v1453 = vmul.f32 %v1437, 0.3275911
        %v1454 = vmul.f32 %v1438, 0.3275911
        %v1455 = vmul.f32 %v1439, 0.3275911
        %v1456 = vmul.f32 %v1440, 0.3275911
        %v1457 = vmul.f32 %v1441, 0.3275911
        %v1458 = vmul.f32 %v1442, 0.3275911
        %v1459 = vmul.f32 %v1443, 0.3275911
        %v1460 = vadd.f32 %v1444, 1.0
        %v1461 = vadd.f32 %v1445, 1.0
        %v1462 = vadd.f32 %v1446, 1.0
        %v1463 = vadd.f32 %v1447, 1.0
        %v1464 = vadd.f32 %v1448, 1.0
        %v1465 = vadd.f32 %v1449, 1.0
        %v1466 = vadd.f32 %v1450, 1.0
        %v1467 = vadd.f32 %v1451, 1.0
        %v1468 = vadd.f32 %v1452, 1.0
        %v1469 = vadd.f32 %v1453, 1.0
        %v1470 = vadd.f32 %v1454, 1.0
        %v1471 = vadd.f32 %v1455, 1.0
        %v1472 = vadd.f32 %v1456, 1.0
        %v1473 = vadd.f32 %v1457, 1.0
        %v1474 = vadd.f32 %v1458, 1.0
        %v1475 = vadd.f32 %v1459, 1.0
        %v1476 = vrcp.pop %v1460
        %v1477 = vmul.f32 1.0, %v1476
        %v1478 = vrcp.pop %v1461
        %v1479 = vmul.f32 1.0, %v1478
        %v1480 = vrcp.pop %v1462
        %v1481 = vmul.f32 1.0, %v1480
        %v1482 = vrcp.pop %v1463
        %v1483 = vmul.f32 1.0, %v1482
        %v1484 = vrcp.pop %v1464
        %v1485 = vmul.f32 1.0, %v1484
        %v1486 = vrcp.pop %v1465
        %v1487 = vmul.f32 1.0, %v1486
        %v1488 = vrcp.pop %v1466
        %v1489 = vmul.f32 1.0, %v1488
        %v1490 = vrcp.pop %v1467
        %v1491 = vmul.f32 1.0, %v1490
        %v1492 = vrcp.pop %v1468
        %v1493 = vmul.f32 1.0, %v1492
        %v1494 = vrcp.pop %v1469
        %v1495 = vmul.f32 1.0, %v1494
        %v1496 = vrcp.pop %v1470
        %v1497 = vmul.f32 1.0, %v1496
        %v1498 = vrcp.pop %v1471
        %v1499 = vmul.f32 1.0, %v1498
        %v1500 = vrcp.pop %v1472
        %v1501 = vmul.f32 1.0, %v1500
        %v1502 = vrcp.pop %v1473
        %v1503 = vmul.f32 1.0, %v1502
        %v1504 = vrcp.pop %v1474
        %v1505 = vmul.f32 1.0, %v1504
        %v1506 = vrcp.pop %v1475
        %v1507 = vmul.f32 1.0, %v1506
        %v1508 = vmul.f32 %v1477, 1.0614054
        %v1509 = vmul.f32 %v1479, 1.0614054
        %v1510 = vmul.f32 %v1481, 1.0614054
        %v1511 = vmul.f32 %v1483, 1.0614054
        %v1512 = vmul.f32 %v1485, 1.0614054
        %v1513 = vmul.f32 %v1487, 1.0614054
        %v1514 = vmul.f32 %v1489, 1.0614054
        %v1515 = vmul.f32 %v1491, 1.0614054
        %v1516 = vmul.f32 %v1493, 1.0614054
        %v1517 = vmul.f32 %v1495, 1.0614054
        %v1518 = vmul.f32 %v1497, 1.0614054
        %v1519 = vmul.f32 %v1499, 1.0614054
        %v1520 = vmul.f32 %v1501, 1.0614054
        %v1521 = vmul.f32 %v1503, 1.0614054
        %v1522 = vmul.f32 %v1505, 1.0614054
        %v1523 = vmul.f32 %v1507, 1.0614054
        %v1524 = vadd.f32 %v1508, -1.4531521
        %v1525 = vadd.f32 %v1509, -1.4531521
        %v1526 = vadd.f32 %v1510, -1.4531521
        %v1527 = vadd.f32 %v1511, -1.4531521
        %v1528 = vadd.f32 %v1512, -1.4531521
        %v1529 = vadd.f32 %v1513, -1.4531521
        %v1530 = vadd.f32 %v1514, -1.4531521
        %v1531 = vadd.f32 %v1515, -1.4531521
        %v1532 = vadd.f32 %v1516, -1.4531521
        %v1533 = vadd.f32 %v1517, -1.4531521
        %v1534 = vadd.f32 %v1518, -1.4531521
        %v1535 = vadd.f32 %v1519, -1.4531521
        %v1536 = vadd.f32 %v1520, -1.4531521
        %v1537 = vadd.f32 %v1521, -1.4531521
        %v1538 = vadd.f32 %v1522, -1.4531521
        %v1539 = vadd.f32 %v1523, -1.4531521
        %v1540 = vmul.f32 %v1524, %v1477
        %v1541 = vmul.f32 %v1525, %v1479
        %v1542 = vmul.f32 %v1526, %v1481
        %v1543 = vmul.f32 %v1527, %v1483
        %v1544 = vmul.f32 %v1528, %v1485
        %v1545 = vmul.f32 %v1529, %v1487
        %v1546 = vmul.f32 %v1530, %v1489
        %v1547 = vmul.f32 %v1531, %v1491
        %v1548 = vmul.f32 %v1532, %v1493
        %v1549 = vmul.f32 %v1533, %v1495
        %v1550 = vmul.f32 %v1534, %v1497
        %v1551 = vmul.f32 %v1535, %v1499
        %v1552 = vmul.f32 %v1536, %v1501
        %v1553 = vmul.f32 %v1537, %v1503
        %v1554 = vmul.f32 %v1538, %v1505
        %v1555 = vmul.f32 %v1539, %v1507
        %v1556 = vadd.f32 %v1540, 1.4214138
        %v1557 = vadd.f32 %v1541, 1.4214138
        %v1558 = vadd.f32 %v1542, 1.4214138
        %v1559 = vadd.f32 %v1543, 1.4214138
        %v1560 = vadd.f32 %v1544, 1.4214138
        %v1561 = vadd.f32 %v1545, 1.4214138
        %v1562 = vadd.f32 %v1546, 1.4214138
        %v1563 = vadd.f32 %v1547, 1.4214138
        %v1564 = vadd.f32 %v1548, 1.4214138
        %v1565 = vadd.f32 %v1549, 1.4214138
        %v1566 = vadd.f32 %v1550, 1.4214138
        %v1567 = vadd.f32 %v1551, 1.4214138
        %v1568 = vadd.f32 %v1552, 1.4214138
        %v1569 = vadd.f32 %v1553, 1.4214138
        %v1570 = vadd.f32 %v1554, 1.4214138
        %v1571 = vadd.f32 %v1555, 1.4214138
        %v1572 = vmul.f32 %v1556, %v1477
        %v1573 = vmul.f32 %v1557, %v1479
        %v1574 = vmul.f32 %v1558, %v1481
        %v1575 = vmul.f32 %v1559, %v1483
        %v1576 = vmul.f32 %v1560, %v1485
        %v1577 = vmul.f32 %v1561, %v1487
        %v1578 = vmul.f32 %v1562, %v1489
        %v1579 = vmul.f32 %v1563, %v1491
        %v1580 = vmul.f32 %v1564, %v1493
        %v1581 = vmul.f32 %v1565, %v1495
        %v1582 = vmul.f32 %v1566, %v1497
        %v1583 = vmul.f32 %v1567, %v1499
        %v1584 = vmul.f32 %v1568, %v1501
        %v1585 = vmul.f32 %v1569, %v1503
        %v1586 = vmul.f32 %v1570, %v1505
        %v1587 = vmul.f32 %v1571, %v1507
        %v1588 = vadd.f32 %v1572, -0.28449672
        %v1589 = vadd.f32 %v1573, -0.28449672
        %v1590 = vadd.f32 %v1574, -0.28449672
        %v1591 = vadd.f32 %v1575, -0.28449672
        %v1592 = vadd.f32 %v1576, -0.28449672
        %v1593 = vadd.f32 %v1577, -0.28449672
        %v1594 = vadd.f32 %v1578, -0.28449672
        %v1595 = vadd.f32 %v1579, -0.28449672
        %v1596 = vadd.f32 %v1580, -0.28449672
        %v1597 = vadd.f32 %v1581, -0.28449672
        %v1598 = vadd.f32 %v1582, -0.28449672
        %v1599 = vadd.f32 %v1583, -0.28449672
        %v1600 = vadd.f32 %v1584, -0.28449672
        %v1601 = vadd.f32 %v1585, -0.28449672
        %v1602 = vadd.f32 %v1586, -0.28449672
        %v1603 = vadd.f32 %v1587, -0.28449672
        %v1604 = vmul.f32 %v1588, %v1477
        %v1605 = vmul.f32 %v1589, %v1479
        %v1606 = vmul.f32 %v1590, %v1481
        %v1607 = vmul.f32 %v1591, %v1483
        %v1608 = vmul.f32 %v1592, %v1485
        %v1609 = vmul.f32 %v1593, %v1487
        %v1610 = vmul.f32 %v1594, %v1489
        %v1611 = vmul.f32 %v1595, %v1491
        %v1612 = vmul.f32 %v1596, %v1493
        %v1613 = vmul.f32 %v1597, %v1495
        %v1614 = vmul.f32 %v1598, %v1497
        %v1615 = vmul.f32 %v1599, %v1499
        %v1616 = vmul.f32 %v1600, %v1501
        %v1617 = vmul.f32 %v1601, %v1503
        %v1618 = vmul.f32 %v1602, %v1505
        %v1619 = vmul.f32 %v1603, %v1507
        %v1620 = vadd.f32 %v1604, 0.2548296
        %v1621 = vadd.f32 %v1605, 0.2548296
        %v1622 = vadd.f32 %v1606, 0.2548296
        %v1623 = vadd.f32 %v1607, 0.2548296
        %v1624 = vadd.f32 %v1608, 0.2548296
        %v1625 = vadd.f32 %v1609, 0.2548296
        %v1626 = vadd.f32 %v1610, 0.2548296
        %v1627 = vadd.f32 %v1611, 0.2548296
        %v1628 = vadd.f32 %v1612, 0.2548296
        %v1629 = vadd.f32 %v1613, 0.2548296
        %v1630 = vadd.f32 %v1614, 0.2548296
        %v1631 = vadd.f32 %v1615, 0.2548296
        %v1632 = vadd.f32 %v1616, 0.2548296
        %v1633 = vadd.f32 %v1617, 0.2548296
        %v1634 = vadd.f32 %v1618, 0.2548296
        %v1635 = vadd.f32 %v1619, 0.2548296
        %v1636 = vmul.f32 %v1620, %v1477
        %v1637 = vmul.f32 %v1621, %v1479
        %v1638 = vmul.f32 %v1622, %v1481
        %v1639 = vmul.f32 %v1623, %v1483
        %v1640 = vmul.f32 %v1624, %v1485
        %v1641 = vmul.f32 %v1625, %v1487
        %v1642 = vmul.f32 %v1626, %v1489
        %v1643 = vmul.f32 %v1627, %v1491
        %v1644 = vmul.f32 %v1628, %v1493
        %v1645 = vmul.f32 %v1629, %v1495
        %v1646 = vmul.f32 %v1630, %v1497
        %v1647 = vmul.f32 %v1631, %v1499
        %v1648 = vmul.f32 %v1632, %v1501
        %v1649 = vmul.f32 %v1633, %v1503
        %v1650 = vmul.f32 %v1634, %v1505
        %v1651 = vmul.f32 %v1635, %v1507
        %v1652 = vsub.f32 0.0, %v1428
        %v1653 = vsub.f32 0.0, %v1429
        %v1654 = vsub.f32 0.0, %v1430
        %v1655 = vsub.f32 0.0, %v1431
        %v1656 = vsub.f32 0.0, %v1432
        %v1657 = vsub.f32 0.0, %v1433
        %v1658 = vsub.f32 0.0, %v1434
        %v1659 = vsub.f32 0.0, %v1435
        %v1660 = vsub.f32 0.0, %v1436
        %v1661 = vsub.f32 0.0, %v1437
        %v1662 = vsub.f32 0.0, %v1438
        %v1663 = vsub.f32 0.0, %v1439
        %v1664 = vsub.f32 0.0, %v1440
        %v1665 = vsub.f32 0.0, %v1441
        %v1666 = vsub.f32 0.0, %v1442
        %v1667 = vsub.f32 0.0, %v1443
        %v1668 = vmul.f32 %v1652, %v1428
        %v1669 = vmul.f32 %v1653, %v1429
        %v1670 = vmul.f32 %v1654, %v1430
        %v1671 = vmul.f32 %v1655, %v1431
        %v1672 = vmul.f32 %v1656, %v1432
        %v1673 = vmul.f32 %v1657, %v1433
        %v1674 = vmul.f32 %v1658, %v1434
        %v1675 = vmul.f32 %v1659, %v1435
        %v1676 = vmul.f32 %v1660, %v1436
        %v1677 = vmul.f32 %v1661, %v1437
        %v1678 = vmul.f32 %v1662, %v1438
        %v1679 = vmul.f32 %v1663, %v1439
        %v1680 = vmul.f32 %v1664, %v1440
        %v1681 = vmul.f32 %v1665, %v1441
        %v1682 = vmul.f32 %v1666, %v1442
        %v1683 = vmul.f32 %v1667, %v1443
        %v1684 = vmul.f32 %v1668, 1.442695
        %v1685 = vpow.pop %v1684
        %v1686 = vmul.f32 %v1669, 1.442695
        %v1687 = vpow.pop %v1686
        %v1688 = vmul.f32 %v1670, 1.442695
        %v1689 = vpow.pop %v1688
        %v1690 = vmul.f32 %v1671, 1.442695
        %v1691 = vpow.pop %v1690
        %v1692 = vmul.f32 %v1672, 1.442695
        %v1693 = vpow.pop %v1692
        %v1694 = vmul.f32 %v1673, 1.442695
        %v1695 = vpow.pop %v1694
        %v1696 = vmul.f32 %v1674, 1.442695
        %v1697 = vpow.pop %v1696
        %v1698 = vmul.f32 %v1675, 1.442695
        %v1699 = vpow.pop %v1698
        %v1700 = vmul.f32 %v1676, 1.442695
        %v1701 = vpow.pop %v1700
        %v1702 = vmul.f32 %v1677, 1.442695
        %v1703 = vpow.pop %v1702
        %v1704 = vmul.f32 %v1678, 1.442695
        %v1705 = vpow.pop %v1704
        %v1706 = vmul.f32 %v1679, 1.442695
        %v1707 = vpow.pop %v1706
        %v1708 = vmul.f32 %v1680, 1.442695
        %v1709 = vpow.pop %v1708
        %v1710 = vmul.f32 %v1681, 1.442695
        %v1711 = vpow.pop %v1710
        %v1712 = vmul.f32 %v1682, 1.442695
        %v1713 = vpow.pop %v1712
        %v1714 = vmul.f32 %v1683, 1.442695
        %v1715 = vpow.pop %v1714
        %v1716 = vmul.f32 %v1636, %v1685
        %v1717 = vmul.f32 %v1637, %v1687
        %v1718 = vmul.f32 %v1638, %v1689
        %v1719 = vmul.f32 %v1639, %v1691
        %v1720 = vmul.f32 %v1640, %v1693
        %v1721 = vmul.f32 %v1641, %v1695
        %v1722 = vmul.f32 %v1642, %v1697
        %v1723 = vmul.f32 %v1643, %v1699
        %v1724 = vmul.f32 %v1644, %v1701
        %v1725 = vmul.f32 %v1645, %v1703
        %v1726 = vmul.f32 %v1646, %v1705
        %v1727 = vmul.f32 %v1647, %v1707
        %v1728 = vmul.f32 %v1648, %v1709
        %v1729 = vmul.f32 %v1649, %v1711
        %v1730 = vmul.f32 %v1650, %v1713
        %v1731 = vmul.f32 %v1651, %v1715
        %v1732 = vsub.f32 1.0, %v1716
        %v1733 = vsub.f32 1.0, %v1717
        %v1734 = vsub.f32 1.0, %v1718
        %v1735 = vsub.f32 1.0, %v1719
        %v1736 = vsub.f32 1.0, %v1720
        %v1737 = vsub.f32 1.0, %v1721
        %v1738 = vsub.f32 1.0, %v1722
        %v1739 = vsub.f32 1.0, %v1723
        %v1740 = vsub.f32 1.0, %v1724
        %v1741 = vsub.f32 1.0, %v1725
        %v1742 = vsub.f32 1.0, %v1726
        %v1743 = vsub.f32 1.0, %v1727
        %v1744 = vsub.f32 1.0, %v1728
        %v1745 = vsub.f32 1.0, %v1729
        %v1746 = vsub.f32 1.0, %v1730
        %v1747 = vsub.f32 1.0, %v1731
        %v1748 = vmul.f32 %v1412, %v1732
        %v1749 = vmul.f32 %v1413, %v1733
        %v1750 = vmul.f32 %v1414, %v1734
        %v1751 = vmul.f32 %v1415, %v1735
        %v1752 = vmul.f32 %v1416, %v1736
        %v1753 = vmul.f32 %v1417, %v1737
        %v1754 = vmul.f32 %v1418, %v1738
        %v1755 = vmul.f32 %v1419, %v1739
        %v1756 = vmul.f32 %v1420, %v1740
        %v1757 = vmul.f32 %v1421, %v1741
        %v1758 = vmul.f32 %v1422, %v1742
        %v1759 = vmul.f32 %v1423, %v1743
        %v1760 = vmul.f32 %v1424, %v1744
        %v1761 = vmul.f32 %v1425, %v1745
        %v1762 = vmul.f32 %v1426, %v1746
        %v1763 = vmul.f32 %v1427, %v1747
        %v1764 = vadd.f32 %v1748, 1.0
        %v1765 = vadd.f32 %v1749, 1.0
        %v1766 = vadd.f32 %v1750, 1.0
        %v1767 = vadd.f32 %v1751, 1.0
        %v1768 = vadd.f32 %v1752, 1.0
        %v1769 = vadd.f32 %v1753, 1.0
        %v1770 = vadd.f32 %v1754, 1.0
        %v1771 = vadd.f32 %v1755, 1.0
        %v1772 = vadd.f32 %v1756, 1.0
        %v1773 = vadd.f32 %v1757, 1.0
        %v1774 = vadd.f32 %v1758, 1.0
        %v1775 = vadd.f32 %v1759, 1.0
        %v1776 = vadd.f32 %v1760, 1.0
        %v1777 = vadd.f32 %v1761, 1.0
        %v1778 = vadd.f32 %v1762, 1.0
        %v1779 = vadd.f32 %v1763, 1.0
        %v1780 = vmul.f32 %v1364, %v1764
        %v1781 = vmul.f32 %v1365, %v1765
        %v1782 = vmul.f32 %v1366, %v1766
        %v1783 = vmul.f32 %v1367, %v1767
        %v1784 = vmul.f32 %v1368, %v1768
        %v1785 = vmul.f32 %v1369, %v1769
        %v1786 = vmul.f32 %v1370, %v1770
        %v1787 = vmul.f32 %v1371, %v1771
        %v1788 = vmul.f32 %v1372, %v1772
        %v1789 = vmul.f32 %v1373, %v1773
        %v1790 = vmul.f32 %v1374, %v1774
        %v1791 = vmul.f32 %v1375, %v1775
        %v1792 = vmul.f32 %v1376, %v1776
        %v1793 = vmul.f32 %v1377, %v1777
        %v1794 = vmul.f32 %v1378, %v1778
        %v1795 = vmul.f32 %v1379, %v1779
        %v1796 = vpack.c.bf16 %v1782, %v1780
        %v1797 = vpack.c.bf16 %v1783, %v1781
        %v1798 = vpack.c.bf16 %v1786, %v1784
        %v1799 = vpack.c.bf16 %v1787, %v1785
        %v1800 = vpack.c.bf16 %v1790, %v1788
        %v1801 = vpack.c.bf16 %v1791, %v1789
        %v1802 = vpack.c.bf16 %v1794, %v1792
        %v1803 = vpack.c.bf16 %v1795, %v1793
        %v1804 = vld [vmem:[#allocation10] sm:$0xf]
        %v1805 = vld [vmem:[#allocation10 + $0x4] sm:$0xf]
        %v1806 = vld [vmem:[#allocation10 + $0x8] sm:$0xf]
        %v1807 = vld [vmem:[#allocation10 + $0xc] sm:$0xf]
        %v1808 = vld [vmem:[#allocation10 + $0x10] sm:$0xf]
        %v1809 = vld [vmem:[#allocation10 + $0x14] sm:$0xf]
        %v1810 = vld [vmem:[#allocation10 + $0x18] sm:$0xf]
        %v1811 = vld [vmem:[#allocation10 + $0x1c] sm:$0xf]
        %v1812 = vld [vmem:[#allocation10 + $0x20] sm:$0xf]
        %v1813 = vld [vmem:[#allocation10 + $0x24] sm:$0xf]
        %v1814 = vld [vmem:[#allocation10 + $0x28] sm:$0xf]
        %v1815 = vld [vmem:[#allocation10 + $0x2c] sm:$0xf]
        %v1816 = vld [vmem:[#allocation10 + $0x30] sm:$0xf]
        %v1817 = vld [vmem:[#allocation10 + $0x34] sm:$0xf]
        %v1818 = vld [vmem:[#allocation10 + $0x38] sm:$0xf]
        %v1819 = vld [vmem:[#allocation10 + $0x3c] sm:$0xf]
        %v1820 = vld [vmem:[#allocation10 + $0x40] sm:$0xf]
        %v1821 = vld [vmem:[#allocation10 + $0x44] sm:$0xf]
        %v1822 = vld [vmem:[#allocation10 + $0x48] sm:$0xf]
        %v1823 = vld [vmem:[#allocation10 + $0x4c] sm:$0xf]
        %v1824 = vld [vmem:[#allocation10 + $0x50] sm:$0xf]
        %v1825 = vld [vmem:[#allocation10 + $0x54] sm:$0xf]
        %v1826 = vld [vmem:[#allocation10 + $0x58] sm:$0xf]
        %v1827 = vld [vmem:[#allocation10 + $0x5c] sm:$0xf]
        %v1828 = vld [vmem:[#allocation10 + $0x60] sm:$0xf]
        %v1829 = vld [vmem:[#allocation10 + $0x64] sm:$0xf]
        %v1830 = vld [vmem:[#allocation10 + $0x68] sm:$0xf]
        %v1831 = vld [vmem:[#allocation10 + $0x6c] sm:$0xf]
        %v1832 = vld [vmem:[#allocation10 + $0x70] sm:$0xf]
        %v1833 = vld [vmem:[#allocation10 + $0x74] sm:$0xf]
        %v1834 = vld [vmem:[#allocation10 + $0x78] sm:$0xf]
        %v1835 = vld [vmem:[#allocation10 + $0x7c] sm:$0xf]
        %v1836 = vld [vmem:[%s7] sm:$0x1]
        %v1838 = vlaneseq
        %v1839 = vshrl.u32 %v1838, 7
        %v1840 = vsub.s32 0, %v1839
        %v1841 = vrot.slane %v1836, %v1840
        %v1875 = vunpack.c.l.b16 %v1804
        %v1876 = vunpack.c.l.b16 %v1805
        %v1877 = vunpack.c.l.b16 %v1806
        %v1878 = vunpack.c.l.b16 %v1807
        %v1879 = vunpack.c.l.b16 %v1808
        %v1880 = vunpack.c.l.b16 %v1809
        %v1881 = vunpack.c.l.b16 %v1810
        %v1882 = vunpack.c.l.b16 %v1811
        %v1883 = vunpack.c.l.b16 %v1812
        %v1884 = vunpack.c.l.b16 %v1813
        %v1885 = vunpack.c.l.b16 %v1814
        %v1886 = vunpack.c.l.b16 %v1815
        %v1887 = vunpack.c.l.b16 %v1816
        %v1888 = vunpack.c.l.b16 %v1817
        %v1889 = vunpack.c.l.b16 %v1818
        %v1890 = vunpack.c.l.b16 %v1819
        %v1891 = vunpack.c.l.b16 %v1820
        %v1892 = vunpack.c.l.b16 %v1821
        %v1893 = vunpack.c.l.b16 %v1822
        %v1894 = vunpack.c.l.b16 %v1823
        %v1895 = vunpack.c.l.b16 %v1824
        %v1896 = vunpack.c.l.b16 %v1825
        %v1897 = vunpack.c.l.b16 %v1826
        %v1898 = vunpack.c.l.b16 %v1827
        %v1899 = vunpack.c.l.b16 %v1828
        %v1900 = vunpack.c.l.b16 %v1829
        %v1901 = vunpack.c.l.b16 %v1830
        %v1902 = vunpack.c.l.b16 %v1831
        %v1903 = vunpack.c.l.b16 %v1832
        %v1904 = vunpack.c.l.b16 %v1833
        %v1905 = vunpack.c.l.b16 %v1834
        %v1906 = vunpack.c.l.b16 %v1835
        %v1907 = vpack.c.b16 %v1876, %v1875
        %v1908 = vpack.c.b16 %v1878, %v1877
        %v1909 = vpack.c.b16 %v1880, %v1879
        %v1910 = vpack.c.b16 %v1882, %v1881
        %v1911 = vpack.c.b16 %v1884, %v1883
        %v1912 = vpack.c.b16 %v1886, %v1885
        %v1913 = vpack.c.b16 %v1888, %v1887
        %v1914 = vpack.c.b16 %v1890, %v1889
        %v1915 = vpack.c.b16 %v1892, %v1891
        %v1916 = vpack.c.b16 %v1894, %v1893
        %v1917 = vpack.c.b16 %v1896, %v1895
        %v1918 = vpack.c.b16 %v1898, %v1897
        %v1919 = vpack.c.b16 %v1900, %v1899
        %v1920 = vpack.c.b16 %v1902, %v1901
        %v1921 = vpack.c.b16 %v1904, %v1903
        %v1922 = vpack.c.b16 %v1906, %v1905
        %1939 = vmatprep.subr.bf16.mxu0 0
        %1940 = vmatpush1.bf16.msra.mxu0 %v1914
        %1941 = vmatprep.subr.bf16.mxu0 0
        %1942 = vmatpush1.bf16.msra.mxu0 %v1913
        %1943 = vmatprep.subr.bf16.mxu0 0
        %1944 = vmatpush1.bf16.msra.mxu0 %v1912
        %1945 = vmatprep.subr.bf16.mxu0 0
        %1946 = vmatpush1.bf16.msra.mxu0 %v1911
        %1947 = vmatprep.subr.bf16.mxu0 0
        %1948 = vmatpush1.bf16.msra.mxu0 %v1910
        %1949 = vmatprep.subr.bf16.mxu0 0
        %1950 = vmatpush1.bf16.msra.mxu0 %v1909
        %1951 = vmatprep.subr.bf16.mxu0 0
        %1952 = vmatpush1.bf16.msra.mxu0 %v1908
        %1953 = vmatprep.subr.bf16.mxu0 0
        %1954 = vmatpush1.bf16.msra.mxu0 %v1907
        %1955 = vmatprep.subr.bf16.mxu0 0
        %1956 = vmatpush2.bf16.msra.mxu0 %v1922
        %1957 = vmatprep.subr.bf16.mxu0 0
        %1958 = vmatpush2.bf16.msra.mxu0 %v1921
        %1959 = vmatprep.subr.bf16.mxu0 0
        %1960 = vmatpush2.bf16.msra.mxu0 %v1920
        %1961 = vmatprep.subr.bf16.mxu0 0
        %1962 = vmatpush2.bf16.msra.mxu0 %v1919
        %1963 = vmatprep.subr.bf16.mxu0 0
        %1964 = vmatpush2.bf16.msra.mxu0 %v1918
        %1965 = vmatprep.subr.bf16.mxu0 0
        %1966 = vmatpush2.bf16.msra.mxu0 %v1917
        %1967 = vmatprep.subr.bf16.mxu0 0
        %1968 = vmatpush2.bf16.msra.mxu0 %v1916
        %1969 = vmatprep.subr.bf16.mxu0 0
        %1970 = vmatpush2.bf16.msra.mxu0 %v1915
        %1971 = vmatprep.mubr.bf16.mxu0 %v1797
        %1972 = vmatmul.mubr.bf16.gmra.mxu0 %v1796
        %v1973 = vpop.f32.mrf.mxu0
        %v1974 = vadd.f32 %v1841, %v1973
        %v1975 = vpop.f32.mrf.mxu0
        %v1976 = vpop.f32.mrf.mxu0
        %v1977 = vadd.f32 %v1841, %v1976
        %v1978 = vpop.f32.mrf.mxu0
        %1979 = vmatprep.mubr.bf16.mxu0 %v1799
        %1980 = vmatmul.mubr.bf16.gmra.mxu0 %v1798
        %v1981 = vpop.f32.mrf.mxu0
        %v1982 = vadd.f32 %v1841, %v1981
        %v1983 = vpop.f32.mrf.mxu0
        %v1984 = vpop.f32.mrf.mxu0
        %v1985 = vadd.f32 %v1841, %v1984
        %v1986 = vpop.f32.mrf.mxu0
        %1987 = vmatprep.mubr.bf16.mxu0 %v1801
        %1988 = vmatmul.mubr.bf16.gmra.mxu0 %v1800
        %v1989 = vpop.f32.mrf.mxu0
        %v1990 = vadd.f32 %v1841, %v1989
        %v1991 = vpop.f32.mrf.mxu0
        %v1992 = vpop.f32.mrf.mxu0
        %v1993 = vadd.f32 %v1841, %v1992
        %v1994 = vpop.f32.mrf.mxu0
        %1995 = vmatprep.mubr.bf16.mxu0 %v1803
        %1996 = vmatmul.mubr.bf16.gmra.mxu0 %v1802
        %v1997 = vpop.f32.mrf.mxu0
        %v1998 = vadd.f32 %v1841, %v1997
        %v1999 = vpop.f32.mrf.mxu0
        %v2000 = vpop.f32.mrf.mxu0
        %v2001 = vadd.f32 %v1841, %v2000
        %v2002 = vpop.f32.mrf.mxu0
        %2003 = vdwg.mxu0
        %v2004 = vpack.c.bf16 %v1977, %v1974
        %v2005 = vpack.c.bf16 %v1985, %v1982
        %v2006 = vpack.c.bf16 %v1993, %v1990
        %v2007 = vpack.c.bf16 %v2001, %v1998
        %v2012 = vunpack.c.l.b16 %v2004
        %v2013 = vunpack.c.h.b16 %v2004
        %v2014 = vunpack.c.l.b16 %v2005
        %v2015 = vunpack.c.h.b16 %v2005
        %v2016 = vunpack.c.l.b16 %v2006
        %v2017 = vunpack.c.h.b16 %v2006
        %v2018 = vunpack.c.l.b16 %v2007
        %v2019 = vunpack.c.h.b16 %v2007
        %v2020 = vpack.c.b16 %v2012, %v2012
        %v2021 = vpack.c.b16 %v2013, %v2013
        %v2022 = vpack.c.b16 %v2014, %v2014
        %v2023 = vpack.c.b16 %v2015, %v2015
        %v2024 = vpack.c.b16 %v2016, %v2016
        %v2025 = vpack.c.b16 %v2017, %v2017
        %v2026 = vpack.c.b16 %v2018, %v2018
        %v2027 = vpack.c.b16 %v2019, %v2019
        %2036 = vst [vmem:[%s430] sm:$0xf] %v2020
        %2037 = vst [vmem:[%s430 + $0x4] sm:$0xf] %v2021
        %2038 = vst [vmem:[%s430 + $0x8] sm:$0xf] %v2022
        %2039 = vst [vmem:[%s430 + $0xc] sm:$0xf] %v2023
        %2040 = vst [vmem:[%s430 + $0x10] sm:$0xf] %v2024
        %2041 = vst [vmem:[%s430 + $0x14] sm:$0xf] %v2025
        %2042 = vst [vmem:[%s430 + $0x18] sm:$0xf] %v2026
        %2043 = vst [vmem:[%s430 + $0x1c] sm:$0xf] %v2027
        %s2044 = sand.u32 %s233, 1
        %s2045 = scalar_lea.sflag [#allocation4], %s2044
        %s2046 = sand.u32 %s233, 1
        %s2047 = smul.addr %s2046, 32
        %s2048 = scalar_lea.vmem [#allocation11], %s2047
        // Predicated region
        $region73: #{tpu_custom_call.1} parent=51 // pred_check
          %p2049 = pneg %p243
        $region74: #{tpu_custom_call.1} parent=51 // pred_check_branch
          %2051 = sbr.rel (%p2049) target = $region76
        $region75: #{tpu_custom_call.1} parent=51 // pred_region
          %s2052 = smul.u32 4, %s34
          %s2054 = ssub.s32 512, 512
          %2055 = vsyncadd %s2045, %s2054
          %s2056 = smul.addr %s2052, 2
          %s2057 = smul.addr %s33, 32
          %s2058 = sadd.s32 %s2056, %s2057
          %s2059 = smul.addr %s2058, 64
          %s2060 = scalar_lea.hbm %s8, %s2059
          %s2061 = sshll.u32 %s2048, 4
          %s2062 = int_to_ptr.vmem [resolvable:$true] %s2061
          %2067 = dma.vmem_to_hbm [thread:$0]  %s2062, 512, %s2060, %s2045, 64, 64, 4
        $region76: #{tpu_custom_call.1} parent=51 // pred_fallthru
          _
      $region52: #{tpu_custom_call.1} parent=5 // pred_fallthru
        _
      %p2068 = scmp.le.s32.totalorder 2, %s24
      // Predicated region
      $region77: #{tpu_custom_call.1} parent=5 // pred_check
        %p2069 = pneg %p2068
      $region78: #{tpu_custom_call.1} parent=5 // pred_check_branch
        %2071 = sbr.rel (%p2069) target = $region80
      $region79: #{tpu_custom_call.1} parent=5 // pred_region
        %s2072 = ssub.s32 %s24, 2
        // Predicated region
        $region81: #{tpu_custom_call.1} parent=79 // pred_check
          %p2073 = pneg %p249
        $region82: #{tpu_custom_call.1} parent=79 // pred_check_branch
          %2075 = sbr.rel (%p2073) target = $region84
        $region83: #{tpu_custom_call.1} parent=79 // pred_region
          %s2076 = sand.u32 %s234, 1
          %s2077 = scalar_lea.sflag [#allocation4], %s2076
          %s2078 = sand.u32 %s234, 1
          %s2079 = smul.addr %s2078, 32
          %s2080 = scalar_lea.vmem [#allocation11], %s2079
          %2081 = dma.done %s2077, 512
        $region84: #{tpu_custom_call.1} parent=79 // pred_fallthru
          _
      $region80: #{tpu_custom_call.1} parent=5 // pred_fallthru
        _
    $region6: #{tpu_custom_call.1} parent=1 // loop_footer
      %s28 = sadd.s32 1, %s24
    $region7: #{tpu_custom_call.1} parent=1 // loop_footer_branch
      %23 = sbr.rel target = $region3
    $region8: #{tpu_custom_call.1} parent=1 // loop_exit
      _
    %2082 = vsyncpa [#allocation3], 1
    %s2083 = scalar_lea.sflag [#allocation3], 1
    %2084 = vsyncpa %s2083, 1
    %2085 = vsyncpa [#allocation6], 1
    %s2086 = scalar_lea.sflag [#allocation6], 1
    %2087 = vsyncpa %s2086, 1
    %2088 = vsyncpa [#allocation9], 1
    %2089 = vsyncpa [#allocation4], 1
    %s2090 = scalar_lea.sflag [#allocation4], 1
    %2091 = vsyncpa %s2090, 1

</llo_original>
